<compile_context>
chip_gen: v7x
topology: tpu7x:2x2x1
jax: 0.10.0
libtpu: 0.0.40
codegen_flags: <defaults>
</compile_context>

<pallas_src>
import functools

import jax
import jax.numpy as jnp
from jax.experimental import pallas as pl
from jax.experimental.pallas import tpu as pltpu

_LANE = 128                  # TPU lane width: head outputs padded to multiples of this
_TK_MAX = 2048               # cap on the backbone reduction (K) chunk per grid step
USE_BF16_MATMUL = True       # bf16 MXU inputs, f32 accumulate (set False for f32-exact)


def _round_up(n, m):
    return ((n + m - 1) // m) * m


def _row_tile(B):
    """Row tile: keep M in the 8..128 sweet spot; split when batch allows (v7x megacore)."""
    tm = B
    for t in (128, 64, 32, 16, 8):
        if B % t == 0:
            tm = t
            break
    if B // tm < 2 and tm >= 16:   # give the 2nd TensorCore (v7x) a grid point
        tm //= 2
    return tm


def _k_tile(flat):
    """Backbone K chunk: a multiple of 128 (lane rule) no larger than _TK_MAX."""
    if flat <= _TK_MAX:
        return flat
    t = (_TK_MAX // _LANE) * _LANE
    while t >= _LANE:
        if flat % t == 0:
            return t
        t -= _LANE
    return flat


def _spec(shape, index_map, buffers=None):
    """BlockSpec; grid-constant operands request single buffering (halves VMEM)."""
    if buffers is not None:
        try:
            return pl.BlockSpec(shape, index_map, pipeline_mode=pl.Buffered(buffers))
        except Exception:  # older jax without pipeline_mode/Buffered: default buffering
            pass
    return pl.BlockSpec(shape, index_map)


# ----------------------------------------------------------------------------
# Kernels
# ----------------------------------------------------------------------------

def _fused_forward_kernel(class_num, pad_i, nk,
                          xi_ref, xj_ref, xs_ref,
                          bb_w_ref, bb_b_ref,
                          w1_ref, b1_ref,
                          w2_ref, b2_ref,
                          z_ref, c_ref,
                          *scratch):
    """backbone -> (instance | cluster) projectors for all three views, one kernel.

    x*: (tm, tk)        bb_w: (tk, rep)        w1: (rep, 2*rep)
    w2: (2*rep, pad_i + pad_c) block-diagonal  z_ref/c_ref: (3, tm, pad_*)
    """
    cdt = bb_w_ref.dtype                       # matmul compute dtype (bf16 or f32)
    pad_c = w2_ref.shape[1] - pad_i

    # Hoisted lane-validity row for the softmax mask (broadcasts over sublanes).
    valid = jax.lax.broadcasted_iota(jnp.int32, (1, pad_c), 1) < class_num

    def emit_view(v, h_pre):
        # Backbone bias + ReLU (h_pre is the f32 pre-activation matmul result).
        h = jnp.maximum(h_pre + bb_b_ref[...], 0.0)
        # Fused projector layer 1 (instance cols | cluster cols), 2*rep lanes wide.
        t = jnp.dot(h.astype(cdt), w1_ref[...], preferred_element_type=jnp.float32)
        t = jnp.maximum(t + b1_ref[...], 0.0)
        # Block-diagonal projector layer 2 -> [instance(pad_i) | cluster(pad_c)].
        o = jnp.dot(t.astype(cdt), w2_ref[...], preferred_element_type=jnp.float32)
        o = o + b2_ref[...]
        z = o[:, :pad_i]         # pad lanes >= feature_dim are exactly 0
        logits = o[:, pad_i:]    # pad lanes >= class_num  are exactly 0

        # F.normalize(dim=1): pad lanes are zero, so the full-lane sum of squares
        # is exact; one EUP rsqrt (equiv. to x / max(||x||, 1e-12)).
        sq = jnp.sum(z * z, axis=-1, keepdims=True)
        z_ref[v] = z * jax.lax.rsqrt(jnp.maximum(sq, 1e-24))

        # Softmax(dim=1) over the first class_num lanes only.
        m = jnp.max(jnp.where(valid, logits, -jnp.inf), axis=-1, keepdims=True)
        e = jnp.where(valid, jnp.exp(logits - m), 0.0)
        c_ref[v] = e * pl.reciprocal(jnp.sum(e, axis=-1, keepdims=True), approx=True)

    x_refs = (xi_ref, xj_ref, xs_ref)

    if nk == 1:
        # Whole backbone K in one MXU pass per view (small flat_dim).
        for v in range(3):
            h_pre = jnp.dot(x_refs[v][...].astype(cdt), bb_w_ref[...],
                            preferred_element_type=jnp.float32)
            emit_view(v, h_pre)
    else:
        # K-split backbone: accumulate partials in VMEM, finish heads on last chunk.
        h_acc = scratch[0]
        k = pl.program_id(1)

        @pl.when(k == 0)
        def _():
            h_acc[...] = jnp.zeros_like(h_acc)

        for v in range(3):
            h_acc[v] += jnp.dot(x_refs[v][...].astype(cdt), bb_w_ref[...],
                                preferred_element_type=jnp.float32)

        @pl.when(k == nk - 1)
        def _():
            for v in range(3):
                emit_view(v, h_acc[v])


def _cluster_argmax_kernel(class_num,
                           x_ref, bb_w_ref, bb_b_ref,
                           w1_ref, b1_ref, w2_ref, b2_ref,
                           idx_ref):
    """backbone -> cluster projector -> fused argmax (forward_cluster path).

    argmax(softmax(logits)) == argmax(logits), so the softmax/exp is skipped.
    """
    cdt = bb_w_ref.dtype
    h = jnp.dot(x_ref[...].astype(cdt), bb_w_ref[...], preferred_element_type=jnp.float32)
    h = jnp.maximum(h + bb_b_ref[...], 0.0)
    t = jnp.dot(h.astype(cdt), w1_ref[...], preferred_element_type=jnp.float32)
    t = jnp.maximum(t + b1_ref[...], 0.0)
    logits = jnp.dot(t.astype(cdt), w2_ref[...], preferred_element_type=jnp.float32)
    logits = logits + b2_ref[...]

    lane = jax.lax.broadcasted_iota(jnp.int32, logits.shape, 1)
    masked = jnp.where(lane < class_num, logits, -jnp.inf)
    m = jnp.max(masked, axis=-1, keepdims=True)
    # First lane attaining the max (cross-lane min over float lane indices).
    cand = jnp.where(masked == m, lane.astype(jnp.float32), float(class_num))
    idx_ref[...] = jnp.min(cand, axis=-1, keepdims=True).astype(jnp.int32)


# ----------------------------------------------------------------------------
# Wrappers (Network.forward / Network.forward_cluster equivalents)
# ----------------------------------------------------------------------------

def network_forward(params, cfg, x_i, x_j, x_s):
    B = x_i.shape[0]
    flat, rep = cfg["flat_dim"], cfg["rep_dim"]
    pad_i, pad_c = cfg["pad_i"], cfg["pad_c"]
    feature_dim, class_num = cfg["feature_dim"], cfg["class_num"]
    cdt = params["bb_w"].dtype

    # Deliver inputs in the matmul compute dtype (halves x-tile DMA when bf16);
    # the kernel cast was a no-op anyway.
    xi = x_i.reshape(B, flat).astype(cdt)
    xj = x_j.reshape(B, flat).astype(cdt)
    xs = x_s.reshape(B, flat).astype(cdt)

    tm = _row_tile(B)
    tk = _k_tile(flat)
    nk = flat // tk
    grid = (B // tm, nk)

    kern = functools.partial(_fused_forward_kernel, class_num, pad_i, nk)

    # VMEM budget: x tiles (x2 buffers) + bb_w K-chunk (x2) + single-buffered
    # weights/biases + resident outputs (x2) + accumulator scratch, 2x margin.
    wb = jnp.dtype(cdt).itemsize
    need = (3 * tm * tk * wb * 2
            + tk * rep * wb * 2
            + (rep * 2 * rep + 2 * rep * (pad_i + pad_c)) * wb
            + (rep + 2 * rep + (pad_i + pad_c)) * 4
            + 3 * tm * (pad_i + pad_c) * 4 * 2
            + 3 * tm * rep * 4)
    vmem_limit = int(min(max(2 * need, 16 * 2 ** 20), 100 * 2 ** 20))

    flops = 3 * B * 2 * (flat * rep + rep * 2 * rep + 2 * rep * (pad_i + pad_c))
    bytes_accessed = (3 * B * flat * wb
                      + (flat * rep + rep * 2 * rep + 2 * rep * (pad_i + pad_c)) * wb
                      + 3 * B * (pad_i + pad_c) * 4)
    cost = pl.CostEstimate(flops=flops, transcendentals=3 * B * (pad_c + 2),
                           bytes_accessed=bytes_accessed)

    scratch = [pltpu.VMEM((3, tm, rep), jnp.float32)] if nk > 1 else []

    z_pad, c_pad = pl.pallas_call(
        kern,
        out_shape=(jax.ShapeDtypeStruct((3, B, pad_i), jnp.float32),
                   jax.ShapeDtypeStruct((3, B, pad_c), jnp.float32)),
        grid=grid,
        in_specs=[
            pl.BlockSpec((tm, tk), lambda i, k: (i, k)),                  # x_i tile
            pl.BlockSpec((tm, tk), lambda i, k: (i, k)),                  # x_j tile
            pl.BlockSpec((tm, tk), lambda i, k: (i, k)),                  # x_s tile
            pl.BlockSpec((tk, rep), lambda i, k: (k, 0)),                 # backbone W (K-chunk)
            _spec((1, rep), lambda i, k: (0, 0), buffers=1),              # backbone b
            _spec((rep, 2 * rep), lambda i, k: (0, 0), buffers=1),        # fused L1 W
            _spec((1, 2 * rep), lambda i, k: (0, 0), buffers=1),          # fused L1 b
            _spec((2 * rep, pad_i + pad_c), lambda i, k: (0, 0), buffers=1),  # block-diag L2 W
            _spec((1, pad_i + pad_c), lambda i, k: (0, 0), buffers=1),    # L2 b
        ],
        out_specs=(pl.BlockSpec((3, tm, pad_i), lambda i, k: (0, i, 0)),
                   pl.BlockSpec((3, tm, pad_c), lambda i, k: (0, i, 0))),
        scratch_shapes=scratch,
        compiler_params=pltpu.CompilerParams(
            dimension_semantics=("parallel", "arbitrary"),
            vmem_limit_bytes=vmem_limit),
        cost_estimate=cost,
    )(xi, xj, xs,
      params["bb_w"], params["bb_b"],
      params["w1_cat"], params["b1_cat"],
      params["w2_blk"], params["b2_blk"])

    z_i = z_pad[0, :, :feature_dim]
    z_j = z_pad[1, :, :feature_dim]
    z_s = z_pad[2, :, :feature_dim]
    c_i = c_pad[0, :, :class_num]
    c_j = c_pad[1, :, :class_num]
    # c_s is computed under torch.no_grad() in the reference; forward values identical.
    c_s = c_pad[2, :, :class_num]
    return z_i, z_j, z_s, c_i, c_j, c_s


def network_forward_cluster(params, cfg, x):
    B = x.shape[0]
    flat, rep = cfg["flat_dim"], cfg["rep_dim"]
    pad_c, class_num = cfg["pad_c"], cfg["class_num"]
    cdt = params["bb_w"].dtype

    xf = x.reshape(B, flat).astype(cdt)
    tm = _row_tile(B)

    wb = jnp.dtype(cdt).itemsize
    need = (tm * flat * wb * 2
            + (flat * rep + rep * rep + rep * pad_c) * wb
            + (rep + rep + pad_c) * 4
            + tm * 4 * 2)
    vmem_limit = int(min(max(2 * need, 16 * 2 ** 20), 100 * 2 ** 20))
    flops = B * 2 * (flat * rep + rep * rep + rep * pad_c)
    cost = pl.CostEstimate(
        flops=flops, transcendentals=0,
        bytes_accessed=B * flat * wb
        + (flat * rep + rep * rep + rep * pad_c) * wb + B * 4)

    kern = functools.partial(_cluster_argmax_kernel, class_num)

    idx = pl.pallas_call(
        kern,
        out_shape=jax.ShapeDtypeStruct((B, 1), jnp.int32),
        grid=(B // tm,),
        in_specs=[
            pl.BlockSpec((tm, flat), lambda i: (i, 0)),
            _spec((flat, rep), lambda i: (0, 0), buffers=1),
            _spec((1, rep), lambda i: (0, 0), buffers=1),
            _spec((rep, rep), lambda i: (0, 0), buffers=1),
            _spec((1, rep), lambda i: (0, 0), buffers=1),
            _spec((rep, pad_c), lambda i: (0, 0), buffers=1),
            _spec((1, pad_c), lambda i: (0, 0), buffers=1),
        ],
        out_specs=pl.BlockSpec((tm, 1), lambda i: (i, 0)),
        compiler_params=pltpu.CompilerParams(
            dimension_semantics=("parallel",), vmem_limit_bytes=vmem_limit),
        cost_estimate=cost,
    )(xf, params["bb_w"], params["bb_b"],
      params["cp1_w"], params["cp1_b"],
      params["cp2_w_pad"], params["cp2_b_pad"])

    return idx[:, 0]


# ----------------------------------------------------------------------------
# Parameter init (deterministic, PyTorch-Linear-style uniform(-1/sqrt(fan_in)))
# ----------------------------------------------------------------------------

def _linear_params(key, fan_in, fan_out):
    kw, kb = jax.random.split(key)
    bound = 1.0 / (fan_in ** 0.5)
    w = jax.random.uniform(kw, (fan_in, fan_out), jnp.float32, -bound, bound)
    b = jax.random.uniform(kb, (1, fan_out), jnp.float32, -bound, bound)
    return w, b


def init_params(key, flat_dim, rep_dim, feature_dim, class_num,
                compute_dtype=jnp.float32):
    ks = jax.random.split(key, 5)
    bb_w, bb_b = _linear_params(ks[0], flat_dim, rep_dim)        # backbone stand-in
    ip1_w, ip1_b = _linear_params(ks[1], rep_dim, rep_dim)       # instance proj L1
    ip2_w, ip2_b = _linear_params(ks[2], rep_dim, feature_dim)   # instance proj L2
    cp1_w, cp1_b = _linear_params(ks[3], rep_dim, rep_dim)       # cluster proj L1
    cp2_w, cp2_b = _linear_params(ks[4], rep_dim, class_num)     # cluster proj L2

    pad_i = _round_up(feature_dim, _LANE)
    pad_c = _round_up(class_num, _LANE)

    # Fused layer-1 weights: [rep, 2*rep] (instance cols | cluster cols).
    w1_cat = jnp.concatenate([ip1_w, cp1_w], axis=1)
    b1_cat = jnp.concatenate([ip1_b, cp1_b], axis=1)

    # Block-diagonal, lane-padded layer-2 weights: [2*rep, pad_i + pad_c].
    # Pad columns are exactly zero (required by the unmasked L2 norm + softmax mask).
    w2_blk = jnp.zeros((2 * rep_dim, pad_i + pad_c), jnp.float32)
    w2_blk = w2_blk.at[:rep_dim, :feature_dim].set(ip2_w)
    w2_blk = w2_blk.at[rep_dim:, pad_i:pad_i + class_num].set(cp2_w)
    b2_blk = jnp.zeros((1, pad_i + pad_c), jnp.float32)
    b2_blk = b2_blk.at[:, :feature_dim].set(ip2_b)
    b2_blk = b2_blk.at[:, pad_i:pad_i + class_num].set(cp2_b)

    # Cluster-only (forward_cluster) padded second layer.
    cp2_w_pad = jnp.zeros((rep_dim, pad_c), jnp.float32).at[:, :class_num].set(cp2_w)
    cp2_b_pad = jnp.zeros((1, pad_c), jnp.float32).at[:, :class_num].set(cp2_b)

    params = {
        "bb_w": bb_w.astype(compute_dtype), "bb_b": bb_b,
        "w1_cat": w1_cat.astype(compute_dtype), "b1_cat": b1_cat,
        "w2_blk": w2_blk.astype(compute_dtype), "b2_blk": b2_blk,
        "cp1_w": cp1_w.astype(compute_dtype), "cp1_b": cp1_b,
        "cp2_w_pad": cp2_w_pad.astype(compute_dtype), "cp2_b_pad": cp2_b_pad,
    }
    raw = dict(bb_w=bb_w, bb_b=bb_b, ip1_w=ip1_w, ip1_b=ip1_b, ip2_w=ip2_w,
               ip2_b=ip2_b, cp1_w=cp1_w, cp1_b=cp1_b, cp2_w=cp2_w, cp2_b=cp2_b)
    cfg = dict(flat_dim=flat_dim, rep_dim=rep_dim, feature_dim=feature_dim,
               class_num=class_num, pad_i=pad_i, pad_c=pad_c)
    return params, cfg, raw


# ----------------------------------------------------------------------------
# Pure-JAX f32 reference (mirrors the PyTorch forward) for validation
# ----------------------------------------------------------------------------

def _ref_forward(raw, x_i, x_j, x_s):
    def backbone(x):
        xf = x.reshape(x.shape[0], -1)
        return jnp.maximum(xf @ raw["bb_w"] + raw["bb_b"], 0.0)

    def inst(h):
        t = jnp.maximum(h @ raw["ip1_w"] + raw["ip1_b"], 0.0)
        z = t @ raw["ip2_w"] + raw["ip2_b"]
        n = jnp.maximum(jnp.linalg.norm(z, axis=1, keepdims=True), 1e-12)
        return z / n

    def clus(h):
        t = jnp.maximum(h @ raw["cp1_w"] + raw["cp1_b"], 0.0)
        logits = t @ raw["cp2_w"] + raw["cp2_b"]
        return jax.nn.softmax(logits, axis=1)

    h_i, h_j, h_s = backbone(x_i), backbone(x_j), backbone(x_s)
    return inst(h_i), inst(h_j), inst(h_s), clus(h_i), clus(h_j), clus(h_s)


# ----------------------------------------------------------------------------
# Main
# ----------------------------------------------------------------------------

if __name__ == "__main__":
    # Small shapes consistent with the module's forward.
    B, C, H, W = 8, 4, 8, 8
    rep_dim, feature_dim, class_num = 128, 64, 10
    flat_dim = C * H * W

    compute_dtype = jnp.bfloat16 if USE_BF16_MATMUL else jnp.float32

    key = jax.random.PRNGKey(0)
    k_par, k_i, k_j, k_s = jax.random.split(key, 4)

    params, cfg, raw = init_params(k_par, flat_dim, rep_dim, feature_dim,
                                   class_num, compute_dtype)

    x_i = jax.random.normal(k_i, (B, C, H, W), jnp.float32)
    x_j = jax.random.normal(k_j, (B, C, H, W), jnp.float32)
    x_s = jax.random.normal(k_s, (B, C, H, W), jnp.float32)

    outs = jax.block_until_ready(network_forward(params, cfg, x_i, x_j, x_s))
    z_i, z_j, z_s, c_i, c_j, c_s = outs

    assert z_i.shape == (B, feature_dim) and c_i.shape == (B, class_num)
    # sanity: unit-norm instance features, softmax rows sum to ~1
    # (approx EUP reciprocal + bf16 matmuls -> loose tolerances)
    assert bool(jnp.allclose(jnp.linalg.norm(z_i, axis=1), 1.0, atol=1e-2))
    assert bool(jnp.allclose(jnp.sum(c_i, axis=1), 1.0, atol=1e-2))

    # compare against the pure-JAX f32 reference
    refs = _ref_forward(raw, x_i, x_j, x_s)
    for got, want in zip(outs, refs):
        assert got.shape == want.shape
        assert bool(jnp.allclose(got, want, rtol=5e-2, atol=5e-2)), \
            float(jnp.max(jnp.abs(got - want)))

    # forward_cluster path (argmax fused into the kernel)
    labels = jax.block_until_ready(network_forward_cluster(params, cfg, x_i))
    assert labels.shape == (B,)
    assert bool(jnp.all((labels >= 0) & (labels < class_num)))

    print("KERNEL_OK")
</pallas_src>

<mosaic_0001>
module attributes {stable_mosaic.version = 11 : i64} {
  func.func @_fused_forward_kernel(%arg0: i32, %arg1: i32, %arg2: memref<8x256xbf16, #tpu.memory_space<vmem>>, %arg3: memref<8x256xbf16, #tpu.memory_space<vmem>>, %arg4: memref<8x256xbf16, #tpu.memory_space<vmem>>, %arg5: memref<256x128xbf16, #tpu.memory_space<vmem>>, %arg6: memref<1x128xf32, #tpu.memory_space<vmem>>, %arg7: memref<128x256xbf16, #tpu.memory_space<vmem>>, %arg8: memref<1x256xf32, #tpu.memory_space<vmem>>, %arg9: memref<256x256xbf16, #tpu.memory_space<vmem>>, %arg10: memref<1x256xf32, #tpu.memory_space<vmem>>, %arg11: memref<3x8x128xf32, #tpu.memory_space<vmem>>, %arg12: memref<3x8x128xf32, #tpu.memory_space<vmem>>) attributes {dimension_semantics = [#tpu.dimension_semantics<parallel>, #tpu.dimension_semantics<arbitrary>], iteration_bounds = array<i64: 1, 1>, scalar_prefetch = 0 : i64, scratch_operands = 0 : i64, tpu.core_type = #tpu.core_type<tc>, window_params = [{transform_indices = @transform_0, window_bounds = array<i64: 8, 256>}, {transform_indices = @transform_1, window_bounds = array<i64: 8, 256>}, {transform_indices = @transform_2, window_bounds = array<i64: 8, 256>}, {transform_indices = @transform_3, window_bounds = array<i64: 256, 128>}, {pipeline_mode = #tpu.pipeline_mode<synchronous>, transform_indices = @transform_4, window_bounds = array<i64: 1, 128>}, {pipeline_mode = #tpu.pipeline_mode<synchronous>, transform_indices = @transform_5, window_bounds = array<i64: 128, 256>}, {pipeline_mode = #tpu.pipeline_mode<synchronous>, transform_indices = @transform_6, window_bounds = array<i64: 1, 256>}, {pipeline_mode = #tpu.pipeline_mode<synchronous>, transform_indices = @transform_7, window_bounds = array<i64: 256, 256>}, {pipeline_mode = #tpu.pipeline_mode<synchronous>, transform_indices = @transform_8, window_bounds = array<i64: 1, 256>}, {transform_indices = @transform_9, window_bounds = array<i64: 3, 8, 128>}, {transform_indices = @transform_10, window_bounds = array<i64: 3, 8, 128>}]} {
    %0 = tpu.iota {dimensions = array<i32: 1>} : vector<1x128xi32>
    %c10_i32 = arith.constant 10 : i32
    %1 = vector.broadcast %c10_i32 : i32 to vector<1x128xi32>
    %2 = arith.cmpi slt, %0, %1 : vector<1x128xi32>
    %c0 = arith.constant 0 : index
    %c0_0 = arith.constant 0 : index
    %3 = vector.load %arg2[%c0, %c0_0] : memref<8x256xbf16, #tpu.memory_space<vmem>>, vector<8x256xbf16>
    %c0_1 = arith.constant 0 : index
    %c0_2 = arith.constant 0 : index
    %4 = vector.load %arg5[%c0_1, %c0_2] : memref<256x128xbf16, #tpu.memory_space<vmem>>, vector<256x128xbf16>
    %cst = arith.constant dense<0.000000e+00> : vector<8x128xf32>
    %5 = tpu.matmul %3, %4, %cst {dimension_numbers = #tpu.dot_dimension_numbers<[1], [0], [0], [1], [0, 0, 1, 1], [], []>} : vector<8x256xbf16>, vector<256x128xbf16>, vector<8x128xf32> -> vector<8x128xf32>
    %c0_3 = arith.constant 0 : index
    %c0_4 = arith.constant 0 : index
    %6 = vector.load %arg6[%c0_3, %c0_4] : memref<1x128xf32, #tpu.memory_space<vmem>>, vector<1x128xf32>
    %7 = vector.broadcast %6 : vector<1x128xf32> to vector<8x128xf32>
    %8 = arith.addf %5, %7 : vector<8x128xf32>
    %cst_5 = arith.constant 0.000000e+00 : f32
    %9 = vector.broadcast %cst_5 : f32 to vector<8x128xf32>
    %10 = arith.maximumf %8, %9 : vector<8x128xf32>
    %11 = arith.truncf %10 : vector<8x128xf32> to vector<8x128xbf16>
    %c0_6 = arith.constant 0 : index
    %c0_7 = arith.constant 0 : index
    %12 = vector.load %arg7[%c0_6, %c0_7] : memref<128x256xbf16, #tpu.memory_space<vmem>>, vector<128x256xbf16>
    %cst_8 = arith.constant dense<0.000000e+00> : vector<8x256xf32>
    %13 = tpu.matmul %11, %12, %cst_8 {dimension_numbers = #tpu.dot_dimension_numbers<[1], [0], [0], [1], [0, 0, 1, 1], [], []>} : vector<8x128xbf16>, vector<128x256xbf16>, vector<8x256xf32> -> vector<8x256xf32>
    %c0_9 = arith.constant 0 : index
    %c0_10 = arith.constant 0 : index
    %14 = vector.load %arg8[%c0_9, %c0_10] : memref<1x256xf32, #tpu.memory_space<vmem>>, vector<1x256xf32>
    %15 = vector.broadcast %14 : vector<1x256xf32> to vector<8x256xf32>
    %16 = arith.addf %13, %15 : vector<8x256xf32>
    %cst_11 = arith.constant 0.000000e+00 : f32
    %17 = vector.broadcast %cst_11 : f32 to vector<8x256xf32>
    %18 = arith.maximumf %16, %17 : vector<8x256xf32>
    %19 = arith.truncf %18 : vector<8x256xf32> to vector<8x256xbf16>
    %c0_12 = arith.constant 0 : index
    %c0_13 = arith.constant 0 : index
    %20 = vector.load %arg9[%c0_12, %c0_13] : memref<256x256xbf16, #tpu.memory_space<vmem>>, vector<256x256xbf16>
    %cst_14 = arith.constant dense<0.000000e+00> : vector<8x256xf32>
    %21 = tpu.matmul %19, %20, %cst_14 {dimension_numbers = #tpu.dot_dimension_numbers<[1], [0], [0], [1], [0, 0, 1, 1], [], []>} : vector<8x256xbf16>, vector<256x256xbf16>, vector<8x256xf32> -> vector<8x256xf32>
    %c0_15 = arith.constant 0 : index
    %c0_16 = arith.constant 0 : index
    %22 = vector.load %arg10[%c0_15, %c0_16] : memref<1x256xf32, #tpu.memory_space<vmem>>, vector<1x256xf32>
    %23 = vector.broadcast %22 : vector<1x256xf32> to vector<8x256xf32>
    %24 = arith.addf %21, %23 : vector<8x256xf32>
    %25 = vector.extract_strided_slice %24 {offsets = [0, 0], sizes = [8, 128], strides = [1, 1]} : vector<8x256xf32> to vector<8x128xf32>
    %26 = vector.extract_strided_slice %24 {offsets = [0, 128], sizes = [8, 128], strides = [1, 1]} : vector<8x256xf32> to vector<8x128xf32>
    %27 = arith.mulf %25, %25 : vector<8x128xf32>
    %cst_17 = arith.constant dense<0.000000e+00> : vector<8xf32>
    %28 = vector.multi_reduction <add>, %27, %cst_17 [1] : vector<8x128xf32> to vector<8xf32>
    %29 = vector.shape_cast %28 : vector<8xf32> to vector<8x1xf32>
    %cst_18 = arith.constant 1.000000e-24 : f32
    %30 = vector.broadcast %cst_18 : f32 to vector<8x1xf32>
    %31 = arith.maximumf %29, %30 : vector<8x1xf32>
    %32 = math.rsqrt %31 : vector<8x1xf32>
    %33 = vector.broadcast %32 : vector<8x1xf32> to vector<8x128xf32>
    %34 = arith.mulf %25, %33 : vector<8x128xf32>
    %c0_19 = arith.constant 0 : index
    %c0_20 = arith.constant 0 : index
    %c0_21 = arith.constant 0 : index
    %35 = vector.load %arg11[%c0_19, %c0_20, %c0_21] : memref<3x8x128xf32, #tpu.memory_space<vmem>>, vector<1x8x128xf32>
    %36 = vector.shape_cast %35 : vector<1x8x128xf32> to vector<8x128xf32>
    %37 = vector.shape_cast %34 : vector<8x128xf32> to vector<1x8x128xf32>
    tpu.vector_store %arg11[%c0_19, %c0_20, %c0_21], %37 {strides = array<i32>} : memref<3x8x128xf32, #tpu.memory_space<vmem>>, vector<1x8x128xf32>,
    %cst_22 = arith.constant 0xFF800000 : f32
    %38 = vector.shape_cast %2 : vector<1x128xi1> to vector<1x128xi1>
    %39 = vector.broadcast %38 : vector<1x128xi1> to vector<8x128xi1>
    %40 = vector.broadcast %cst_22 : f32 to vector<8x128xf32>
    %41 = arith.select %39, %26, %40 : vector<8x128xi1>, vector<8x128xf32>
    %cst_23 = arith.constant dense<0xFF800000> : vector<8xf32>
    %42 = vector.multi_reduction <maximumf>, %41, %cst_23 [1] : vector<8x128xf32> to vector<8xf32>
    %43 = vector.shape_cast %42 : vector<8xf32> to vector<8x1xf32>
    %44 = vector.broadcast %43 : vector<8x1xf32> to vector<8x128xf32>
    %45 = arith.subf %26, %44 : vector<8x128xf32>
    %46 = math.exp %45 : vector<8x128xf32>
    %cst_24 = arith.constant 0.000000e+00 : f32
    %47 = vector.shape_cast %2 : vector<1x128xi1> to vector<1x128xi1>
    %48 = vector.broadcast %47 : vector<1x128xi1> to vector<8x128xi1>
    %49 = vector.broadcast %cst_24 : f32 to vector<8x128xf32>
    %50 = arith.select %48, %46, %49 : vector<8x128xi1>, vector<8x128xf32>
    %cst_25 = arith.constant dense<0.000000e+00> : vector<8xf32>
    %51 = vector.multi_reduction <add>, %50, %cst_25 [1] : vector<8x128xf32> to vector<8xf32>
    %52 = vector.shape_cast %51 : vector<8xf32> to vector<8x1xf32>
    %53 = tpu.reciprocal %52 {approx = true} : vector<8x1xf32> -> vector<8x1xf32>
    %54 = vector.broadcast %53 : vector<8x1xf32> to vector<8x128xf32>
    %55 = arith.mulf %50, %54 : vector<8x128xf32>
    %c0_26 = arith.constant 0 : index
    %c0_27 = arith.constant 0 : index
    %c0_28 = arith.constant 0 : index
    %56 = vector.load %arg12[%c0_26, %c0_27, %c0_28] : memref<3x8x128xf32, #tpu.memory_space<vmem>>, vector<1x8x128xf32>
    %57 = vector.shape_cast %56 : vector<1x8x128xf32> to vector<8x128xf32>
    %58 = vector.shape_cast %55 : vector<8x128xf32> to vector<1x8x128xf32>
    tpu.vector_store %arg12[%c0_26, %c0_27, %c0_28], %58 {strides = array<i32>} : memref<3x8x128xf32, #tpu.memory_space<vmem>>, vector<1x8x128xf32>,
    %c0_29 = arith.constant 0 : index
    %c0_30 = arith.constant 0 : index
    %59 = vector.load %arg3[%c0_29, %c0_30] : memref<8x256xbf16, #tpu.memory_space<vmem>>, vector<8x256xbf16>
    %c0_31 = arith.constant 0 : index
    %c0_32 = arith.constant 0 : index
    %60 = vector.load %arg5[%c0_31, %c0_32] : memref<256x128xbf16, #tpu.memory_space<vmem>>, vector<256x128xbf16>
    %cst_33 = arith.constant dense<0.000000e+00> : vector<8x128xf32>
    %61 = tpu.matmul %59, %60, %cst_33 {dimension_numbers = #tpu.dot_dimension_numbers<[1], [0], [0], [1], [0, 0, 1, 1], [], []>} : vector<8x256xbf16>, vector<256x128xbf16>, vector<8x128xf32> -> vector<8x128xf32>
    %c0_34 = arith.constant 0 : index
    %c0_35 = arith.constant 0 : index
    %62 = vector.load %arg6[%c0_34, %c0_35] : memref<1x128xf32, #tpu.memory_space<vmem>>, vector<1x128xf32>
    %63 = vector.broadcast %62 : vector<1x128xf32> to vector<8x128xf32>
    %64 = arith.addf %61, %63 : vector<8x128xf32>
    %cst_36 = arith.constant 0.000000e+00 : f32
    %65 = vector.broadcast %cst_36 : f32 to vector<8x128xf32>
    %66 = arith.maximumf %64, %65 : vector<8x128xf32>
    %67 = arith.truncf %66 : vector<8x128xf32> to vector<8x128xbf16>
    %c0_37 = arith.constant 0 : index
    %c0_38 = arith.constant 0 : index
    %68 = vector.load %arg7[%c0_37, %c0_38] : memref<128x256xbf16, #tpu.memory_space<vmem>>, vector<128x256xbf16>
    %cst_39 = arith.constant dense<0.000000e+00> : vector<8x256xf32>
    %69 = tpu.matmul %67, %68, %cst_39 {dimension_numbers = #tpu.dot_dimension_numbers<[1], [0], [0], [1], [0, 0, 1, 1], [], []>} : vector<8x128xbf16>, vector<128x256xbf16>, vector<8x256xf32> -> vector<8x256xf32>
    %c0_40 = arith.constant 0 : index
    %c0_41 = arith.constant 0 : index
    %70 = vector.load %arg8[%c0_40, %c0_41] : memref<1x256xf32, #tpu.memory_space<vmem>>, vector<1x256xf32>
    %71 = vector.broadcast %70 : vector<1x256xf32> to vector<8x256xf32>
    %72 = arith.addf %69, %71 : vector<8x256xf32>
    %cst_42 = arith.constant 0.000000e+00 : f32
    %73 = vector.broadcast %cst_42 : f32 to vector<8x256xf32>
    %74 = arith.maximumf %72, %73 : vector<8x256xf32>
    %75 = arith.truncf %74 : vector<8x256xf32> to vector<8x256xbf16>
    %c0_43 = arith.constant 0 : index
    %c0_44 = arith.constant 0 : index
    %76 = vector.load %arg9[%c0_43, %c0_44] : memref<256x256xbf16, #tpu.memory_space<vmem>>, vector<256x256xbf16>
    %cst_45 = arith.constant dense<0.000000e+00> : vector<8x256xf32>
    %77 = tpu.matmul %75, %76, %cst_45 {dimension_numbers = #tpu.dot_dimension_numbers<[1], [0], [0], [1], [0, 0, 1, 1], [], []>} : vector<8x256xbf16>, vector<256x256xbf16>, vector<8x256xf32> -> vector<8x256xf32>
    %c0_46 = arith.constant 0 : index
    %c0_47 = arith.constant 0 : index
    %78 = vector.load %arg10[%c0_46, %c0_47] : memref<1x256xf32, #tpu.memory_space<vmem>>, vector<1x256xf32>
    %79 = vector.broadcast %78 : vector<1x256xf32> to vector<8x256xf32>
    %80 = arith.addf %77, %79 : vector<8x256xf32>
    %81 = vector.extract_strided_slice %80 {offsets = [0, 0], sizes = [8, 128], strides = [1, 1]} : vector<8x256xf32> to vector<8x128xf32>
    %82 = vector.extract_strided_slice %80 {offsets = [0, 128], sizes = [8, 128], strides = [1, 1]} : vector<8x256xf32> to vector<8x128xf32>
    %83 = arith.mulf %81, %81 : vector<8x128xf32>
    %cst_48 = arith.constant dense<0.000000e+00> : vector<8xf32>
    %84 = vector.multi_reduction <add>, %83, %cst_48 [1] : vector<8x128xf32> to vector<8xf32>
    %85 = vector.shape_cast %84 : vector<8xf32> to vector<8x1xf32>
    %cst_49 = arith.constant 1.000000e-24 : f32
    %86 = vector.broadcast %cst_49 : f32 to vector<8x1xf32>
    %87 = arith.maximumf %85, %86 : vector<8x1xf32>
    %88 = math.rsqrt %87 : vector<8x1xf32>
    %89 = vector.broadcast %88 : vector<8x1xf32> to vector<8x128xf32>
    %90 = arith.mulf %81, %89 : vector<8x128xf32>
    %c1 = arith.constant 1 : index
    %c0_50 = arith.constant 0 : index
    %c0_51 = arith.constant 0 : index
    %91 = vector.load %arg11[%c1, %c0_50, %c0_51] : memref<3x8x128xf32, #tpu.memory_space<vmem>>, vector<1x8x128xf32>
    %92 = vector.shape_cast %91 : vector<1x8x128xf32> to vector<8x128xf32>
    %93 = vector.shape_cast %90 : vector<8x128xf32> to vector<1x8x128xf32>
    tpu.vector_store %arg11[%c1, %c0_50, %c0_51], %93 {strides = array<i32>} : memref<3x8x128xf32, #tpu.memory_space<vmem>>, vector<1x8x128xf32>,
    %cst_52 = arith.constant 0xFF800000 : f32
    %94 = vector.shape_cast %2 : vector<1x128xi1> to vector<1x128xi1>
    %95 = vector.broadcast %94 : vector<1x128xi1> to vector<8x128xi1>
    %96 = vector.broadcast %cst_52 : f32 to vector<8x128xf32>
    %97 = arith.select %95, %82, %96 : vector<8x128xi1>, vector<8x128xf32>
    %cst_53 = arith.constant dense<0xFF800000> : vector<8xf32>
    %98 = vector.multi_reduction <maximumf>, %97, %cst_53 [1] : vector<8x128xf32> to vector<8xf32>
    %99 = vector.shape_cast %98 : vector<8xf32> to vector<8x1xf32>
    %100 = vector.broadcast %99 : vector<8x1xf32> to vector<8x128xf32>
    %101 = arith.subf %82, %100 : vector<8x128xf32>
    %102 = math.exp %101 : vector<8x128xf32>
    %cst_54 = arith.constant 0.000000e+00 : f32
    %103 = vector.shape_cast %2 : vector<1x128xi1> to vector<1x128xi1>
    %104 = vector.broadcast %103 : vector<1x128xi1> to vector<8x128xi1>
    %105 = vector.broadcast %cst_54 : f32 to vector<8x128xf32>
    %106 = arith.select %104, %102, %105 : vector<8x128xi1>, vector<8x128xf32>
    %cst_55 = arith.constant dense<0.000000e+00> : vector<8xf32>
    %107 = vector.multi_reduction <add>, %106, %cst_55 [1] : vector<8x128xf32> to vector<8xf32>
    %108 = vector.shape_cast %107 : vector<8xf32> to vector<8x1xf32>
    %109 = tpu.reciprocal %108 {approx = true} : vector<8x1xf32> -> vector<8x1xf32>
    %110 = vector.broadcast %109 : vector<8x1xf32> to vector<8x128xf32>
    %111 = arith.mulf %106, %110 : vector<8x128xf32>
    %c1_56 = arith.constant 1 : index
    %c0_57 = arith.constant 0 : index
    %c0_58 = arith.constant 0 : index
    %112 = vector.load %arg12[%c1_56, %c0_57, %c0_58] : memref<3x8x128xf32, #tpu.memory_space<vmem>>, vector<1x8x128xf32>
    %113 = vector.shape_cast %112 : vector<1x8x128xf32> to vector<8x128xf32>
    %114 = vector.shape_cast %111 : vector<8x128xf32> to vector<1x8x128xf32>
    tpu.vector_store %arg12[%c1_56, %c0_57, %c0_58], %114 {strides = array<i32>} : memref<3x8x128xf32, #tpu.memory_space<vmem>>, vector<1x8x128xf32>,
    %c0_59 = arith.constant 0 : index
    %c0_60 = arith.constant 0 : index
    %115 = vector.load %arg4[%c0_59, %c0_60] : memref<8x256xbf16, #tpu.memory_space<vmem>>, vector<8x256xbf16>
    %c0_61 = arith.constant 0 : index
    %c0_62 = arith.constant 0 : index
    %116 = vector.load %arg5[%c0_61, %c0_62] : memref<256x128xbf16, #tpu.memory_space<vmem>>, vector<256x128xbf16>
    %cst_63 = arith.constant dense<0.000000e+00> : vector<8x128xf32>
    %117 = tpu.matmul %115, %116, %cst_63 {dimension_numbers = #tpu.dot_dimension_numbers<[1], [0], [0], [1], [0, 0, 1, 1], [], []>} : vector<8x256xbf16>, vector<256x128xbf16>, vector<8x128xf32> -> vector<8x128xf32>
    %c0_64 = arith.constant 0 : index
    %c0_65 = arith.constant 0 : index
    %118 = vector.load %arg6[%c0_64, %c0_65] : memref<1x128xf32, #tpu.memory_space<vmem>>, vector<1x128xf32>
    %119 = vector.broadcast %118 : vector<1x128xf32> to vector<8x128xf32>
    %120 = arith.addf %117, %119 : vector<8x128xf32>
    %cst_66 = arith.constant 0.000000e+00 : f32
    %121 = vector.broadcast %cst_66 : f32 to vector<8x128xf32>
    %122 = arith.maximumf %120, %121 : vector<8x128xf32>
    %123 = arith.truncf %122 : vector<8x128xf32> to vector<8x128xbf16>
    %c0_67 = arith.constant 0 : index
    %c0_68 = arith.constant 0 : index
    %124 = vector.load %arg7[%c0_67, %c0_68] : memref<128x256xbf16, #tpu.memory_space<vmem>>, vector<128x256xbf16>
    %cst_69 = arith.constant dense<0.000000e+00> : vector<8x256xf32>
    %125 = tpu.matmul %123, %124, %cst_69 {dimension_numbers = #tpu.dot_dimension_numbers<[1], [0], [0], [1], [0, 0, 1, 1], [], []>} : vector<8x128xbf16>, vector<128x256xbf16>, vector<8x256xf32> -> vector<8x256xf32>
    %c0_70 = arith.constant 0 : index
    %c0_71 = arith.constant 0 : index
    %126 = vector.load %arg8[%c0_70, %c0_71] : memref<1x256xf32, #tpu.memory_space<vmem>>, vector<1x256xf32>
    %127 = vector.broadcast %126 : vector<1x256xf32> to vector<8x256xf32>
    %128 = arith.addf %125, %127 : vector<8x256xf32>
    %cst_72 = arith.constant 0.000000e+00 : f32
    %129 = vector.broadcast %cst_72 : f32 to vector<8x256xf32>
    %130 = arith.maximumf %128, %129 : vector<8x256xf32>
    %131 = arith.truncf %130 : vector<8x256xf32> to vector<8x256xbf16>
    %c0_73 = arith.constant 0 : index
    %c0_74 = arith.constant 0 : index
    %132 = vector.load %arg9[%c0_73, %c0_74] : memref<256x256xbf16, #tpu.memory_space<vmem>>, vector<256x256xbf16>
    %cst_75 = arith.constant dense<0.000000e+00> : vector<8x256xf32>
    %133 = tpu.matmul %131, %132, %cst_75 {dimension_numbers = #tpu.dot_dimension_numbers<[1], [0], [0], [1], [0, 0, 1, 1], [], []>} : vector<8x256xbf16>, vector<256x256xbf16>, vector<8x256xf32> -> vector<8x256xf32>
    %c0_76 = arith.constant 0 : index
    %c0_77 = arith.constant 0 : index
    %134 = vector.load %arg10[%c0_76, %c0_77] : memref<1x256xf32, #tpu.memory_space<vmem>>, vector<1x256xf32>
    %135 = vector.broadcast %134 : vector<1x256xf32> to vector<8x256xf32>
    %136 = arith.addf %133, %135 : vector<8x256xf32>
    %137 = vector.extract_strided_slice %136 {offsets = [0, 0], sizes = [8, 128], strides = [1, 1]} : vector<8x256xf32> to vector<8x128xf32>
    %138 = vector.extract_strided_slice %136 {offsets = [0, 128], sizes = [8, 128], strides = [1, 1]} : vector<8x256xf32> to vector<8x128xf32>
    %139 = arith.mulf %137, %137 : vector<8x128xf32>
    %cst_78 = arith.constant dense<0.000000e+00> : vector<8xf32>
    %140 = vector.multi_reduction <add>, %139, %cst_78 [1] : vector<8x128xf32> to vector<8xf32>
    %141 = vector.shape_cast %140 : vector<8xf32> to vector<8x1xf32>
    %cst_79 = arith.constant 1.000000e-24 : f32
    %142 = vector.broadcast %cst_79 : f32 to vector<8x1xf32>
    %143 = arith.maximumf %141, %142 : vector<8x1xf32>
    %144 = math.rsqrt %143 : vector<8x1xf32>
    %145 = vector.broadcast %144 : vector<8x1xf32> to vector<8x128xf32>
    %146 = arith.mulf %137, %145 : vector<8x128xf32>
    %c2 = arith.constant 2 : index
    %c0_80 = arith.constant 0 : index
    %c0_81 = arith.constant 0 : index
    %147 = vector.load %arg11[%c2, %c0_80, %c0_81] : memref<3x8x128xf32, #tpu.memory_space<vmem>>, vector<1x8x128xf32>
    %148 = vector.shape_cast %147 : vector<1x8x128xf32> to vector<8x128xf32>
    %149 = vector.shape_cast %146 : vector<8x128xf32> to vector<1x8x128xf32>
    tpu.vector_store %arg11[%c2, %c0_80, %c0_81], %149 {strides = array<i32>} : memref<3x8x128xf32, #tpu.memory_space<vmem>>, vector<1x8x128xf32>,
    %cst_82 = arith.constant 0xFF800000 : f32
    %150 = vector.shape_cast %2 : vector<1x128xi1> to vector<1x128xi1>
    %151 = vector.broadcast %150 : vector<1x128xi1> to vector<8x128xi1>
    %152 = vector.broadcast %cst_82 : f32 to vector<8x128xf32>
    %153 = arith.select %151, %138, %152 : vector<8x128xi1>, vector<8x128xf32>
    %cst_83 = arith.constant dense<0xFF800000> : vector<8xf32>
    %154 = vector.multi_reduction <maximumf>, %153, %cst_83 [1] : vector<8x128xf32> to vector<8xf32>
    %155 = vector.shape_cast %154 : vector<8xf32> to vector<8x1xf32>
    %156 = vector.broadcast %155 : vector<8x1xf32> to vector<8x128xf32>
    %157 = arith.subf %138, %156 : vector<8x128xf32>
    %158 = math.exp %157 : vector<8x128xf32>
    %cst_84 = arith.constant 0.000000e+00 : f32
    %159 = vector.shape_cast %2 : vector<1x128xi1> to vector<1x128xi1>
    %160 = vector.broadcast %159 : vector<1x128xi1> to vector<8x128xi1>
    %161 = vector.broadcast %cst_84 : f32 to vector<8x128xf32>
    %162 = arith.select %160, %158, %161 : vector<8x128xi1>, vector<8x128xf32>
    %cst_85 = arith.constant dense<0.000000e+00> : vector<8xf32>
    %163 = vector.multi_reduction <add>, %162, %cst_85 [1] : vector<8x128xf32> to vector<8xf32>
    %164 = vector.shape_cast %163 : vector<8xf32> to vector<8x1xf32>
    %165 = tpu.reciprocal %164 {approx = true} : vector<8x1xf32> -> vector<8x1xf32>
    %166 = vector.broadcast %165 : vector<8x1xf32> to vector<8x128xf32>
    %167 = arith.mulf %162, %166 : vector<8x128xf32>
    %c2_86 = arith.constant 2 : index
    %c0_87 = arith.constant 0 : index
    %c0_88 = arith.constant 0 : index
    %168 = vector.load %arg12[%c2_86, %c0_87, %c0_88] : memref<3x8x128xf32, #tpu.memory_space<vmem>>, vector<1x8x128xf32>
    %169 = vector.shape_cast %168 : vector<1x8x128xf32> to vector<8x128xf32>
    %170 = vector.shape_cast %167 : vector<8x128xf32> to vector<1x8x128xf32>
    tpu.vector_store %arg12[%c2_86, %c0_87, %c0_88], %170 {strides = array<i32>} : memref<3x8x128xf32, #tpu.memory_space<vmem>>, vector<1x8x128xf32>,
    return
  }
  func.func @transform_0(%arg0: i32, %arg1: i32) -> (i32, i32) {
    %c0_i32 = arith.constant 0 : i32
    return %arg0, %arg1 : i32, i32
  }
  func.func @transform_1(%arg0: i32, %arg1: i32) -> (i32, i32) {
    %c0_i32 = arith.constant 0 : i32
    return %arg0, %arg1 : i32, i32
  }
  func.func @transform_2(%arg0: i32, %arg1: i32) -> (i32, i32) {
    %c0_i32 = arith.constant 0 : i32
    return %arg0, %arg1 : i32, i32
  }
  func.func @transform_3(%arg0: i32, %arg1: i32) -> (i32, i32) {
    %c0_i32 = arith.constant 0 : i32
    %c0_i32_0 = arith.constant 0 : i32
    return %arg1, %c0_i32 : i32, i32
  }
  func.func @transform_4(%arg0: i32, %arg1: i32) -> (i32, i32) {
    %c0_i32 = arith.constant 0 : i32
    %c0_i32_0 = arith.constant 0 : i32
    %c0_i32_1 = arith.constant 0 : i32
    return %c0_i32, %c0_i32_0 : i32, i32
  }
  func.func @transform_5(%arg0: i32, %arg1: i32) -> (i32, i32) {
    %c0_i32 = arith.constant 0 : i32
    %c0_i32_0 = arith.constant 0 : i32
    %c0_i32_1 = arith.constant 0 : i32
    return %c0_i32, %c0_i32_0 : i32, i32
  }
  func.func @transform_6(%arg0: i32, %arg1: i32) -> (i32, i32) {
    %c0_i32 = arith.constant 0 : i32
    %c0_i32_0 = arith.constant 0 : i32
    %c0_i32_1 = arith.constant 0 : i32
    return %c0_i32, %c0_i32_0 : i32, i32
  }
  func.func @transform_7(%arg0: i32, %arg1: i32) -> (i32, i32) {
    %c0_i32 = arith.constant 0 : i32
    %c0_i32_0 = arith.constant 0 : i32
    %c0_i32_1 = arith.constant 0 : i32
    return %c0_i32, %c0_i32_0 : i32, i32
  }
  func.func @transform_8(%arg0: i32, %arg1: i32) -> (i32, i32) {
    %c0_i32 = arith.constant 0 : i32
    %c0_i32_0 = arith.constant 0 : i32
    %c0_i32_1 = arith.constant 0 : i32
    return %c0_i32, %c0_i32_0 : i32, i32
  }
  func.func @transform_9(%arg0: i32, %arg1: i32) -> (i32, i32, i32) {
    %c0_i32 = arith.constant 0 : i32
    %c0_i32_0 = arith.constant 0 : i32
    %c0_i32_1 = arith.constant 0 : i32
    return %c0_i32, %arg0, %c0_i32_0 : i32, i32, i32
  }
  func.func @transform_10(%arg0: i32, %arg1: i32) -> (i32, i32, i32) {
    %c0_i32 = arith.constant 0 : i32
    %c0_i32_0 = arith.constant 0 : i32
    %c0_i32_1 = arith.constant 0 : i32
    return %c0_i32, %arg0, %c0_i32_0 : i32, i32, i32
  }
}

</mosaic_0001>

<llo_original>
// kernel: tpu_custom_call.1
$region0: #{tpu_custom_call.1}
  #allocation0 [shape = 'u32[]', space=smem, size = 0x4, offset = 0x4, fixed_abs, tag = 'smem constant byte address 0x4 - core index']
  #allocation1 [shape = 'u32[144,128]{1,0:T(1,128)}', space=vmem, size = 0x12000, scoped, tag = 'internal scratch']
  %s0 = inlined_call_operand.hbm [shape: bf16[8,256], index: 0, kind: input, shape index: {}]
  %s1 = inlined_call_operand.hbm [shape: bf16[8,256], index: 1, kind: input, shape index: {}]
  %s2 = inlined_call_operand.hbm [shape: bf16[8,256], index: 2, kind: input, shape index: {}]
  %s3 = inlined_call_operand.hbm [shape: bf16[256,128], index: 3, kind: input, shape index: {}]
  %s4 = inlined_call_operand.vmem [shape: f32[1,128], index: 4, kind: input, shape index: {}]
  %s5 = inlined_call_operand.hbm [shape: bf16[128,256], index: 5, kind: input, shape index: {}]
  %s6 = inlined_call_operand.vmem [shape: f32[1,256], index: 6, kind: input, shape index: {}]
  %s7 = inlined_call_operand.hbm [shape: bf16[256,256], index: 7, kind: input, shape index: {}]
  %s8 = inlined_call_operand.vmem [shape: f32[1,256], index: 8, kind: input, shape index: {}]
  %s9 = inlined_call_operand.hbm [shape: f32[3,8,128], index: 9, kind: output, shape index: {0}]
  %s10 = inlined_call_operand.hbm [shape: f32[3,8,128], index: 10, kind: output, shape index: {1}]
  %11 = xla_tuple %s9, %s10
  %s12 = sld [smem:[#allocation0]]
  $region78: #{tpu_custom_call.1} parent=0
    _
  %s14 = ssub.s32 1, %s12
  %s15 = scalar_select 0, %s14, %s12
  $region1: #{tpu_custom_call.1} parent=0
    #allocation2 [shape = 'u8[4096]{0}', space=vmem, size = 0x1000, scoped, tag = 'input window, operand 0, single buffered']
    #allocation3 [shape = 's32[1]{0}', space=sflag, size = 0x4, scoped, tag = 'scoped memory for tpu_custom_call.1']
    #allocation4 [shape = 's32[1]{0}', space=sflag, size = 0x4, scoped, tag = 'scoped memory for tpu_custom_call.1']
    #allocation5 [shape = 'u8[4096]{0}', space=vmem, size = 0x1000, scoped, tag = 'input window, operand 1, single buffered']
    #allocation6 [shape = 's32[1]{0}', space=sflag, size = 0x4, scoped, tag = 'scoped memory for tpu_custom_call.1']
    #allocation7 [shape = 'u8[4096]{0}', space=vmem, size = 0x1000, scoped, tag = 'input window, operand 2, single buffered']
    #allocation8 [shape = 'u8[65536]{0}', space=vmem, size = 0x10000, scoped, tag = 'input window, operand 3, single buffered']
    #allocation9 [shape = 's32[1]{0}', space=sflag, size = 0x4, scoped, tag = 'scoped memory for tpu_custom_call.1']
    #allocation10 [shape = 'u8[65536]{0}', space=vmem, size = 0x10000, scoped, tag = 'input window, operand 5, single buffered']
    #allocation11 [shape = 'u8[131072]{0}', space=vmem, size = 0x20000, scoped, tag = 'input window, operand 7, single buffered']
    #allocation12 [shape = 's32[1]{0}', space=sflag, size = 0x4, scoped, tag = 'scoped memory for tpu_custom_call.1']
    #allocation13 [shape = 'u8[12288]{0}', space=vmem, size = 0x3000, scoped, tag = 'output window, operand 0, single buffered']
    #allocation14 [shape = 'u8[12288]{0}', space=vmem, size = 0x3000, scoped, tag = 'output window, operand 1, single buffered']
    #allocation15 [shape = 's32[1]{0}', space=sflag, size = 0x4, scoped, tag = 'scoped memory for tpu_custom_call.1']
    %16 = vsyncpa [#allocation3], 0
    %17 = vsyncpa [#allocation6], 0
    %18 = vsyncpa [#allocation9], 0
    %19 = vsyncpa [#allocation12], 0
    %20 = vsyncpa [#allocation4], 0
    %21 = vsyncpa [#allocation15], 0
    // Predicated region
    $region2: #{tpu_custom_call.1} parent=1 // pred_check
      _
    $region3: #{tpu_custom_call.1} parent=1 // pred_check_branch
      %23 = sbr.rel (0) target = $region5
    $region4: #{tpu_custom_call.1} parent=1 // pred_region
      %s25 = ssub.s32 128, 128
      %26 = vsyncadd [#allocation3], %s25
      %s28 = sshll.u32 [#allocation2], 4
      %s29 = int_to_ptr.vmem [resolvable:$true] %s28
      %31 = dma.hbm_to_vmem [thread:$0]  %s0, 128, %s29, [#allocation3]
    $region5: #{tpu_custom_call.1} parent=1 // pred_fallthru
      _
    // Predicated region
    $region6: #{tpu_custom_call.1} parent=1 // pred_check
      _
    $region7: #{tpu_custom_call.1} parent=1 // pred_check_branch
      %33 = sbr.rel (0) target = $region9
    $region8: #{tpu_custom_call.1} parent=1 // pred_region
      %s35 = ssub.s32 128, 128
      %36 = vsyncadd [#allocation6], %s35
      %s38 = sshll.u32 [#allocation5], 4
      %s39 = int_to_ptr.vmem [resolvable:$true] %s38
      %41 = dma.hbm_to_vmem [thread:$0]  %s1, 128, %s39, [#allocation6]
    $region9: #{tpu_custom_call.1} parent=1 // pred_fallthru
      _
    // Predicated region
    $region10: #{tpu_custom_call.1} parent=1 // pred_check
      _
    $region11: #{tpu_custom_call.1} parent=1 // pred_check_branch
      %43 = sbr.rel (0) target = $region13
    $region12: #{tpu_custom_call.1} parent=1 // pred_region
      %s45 = ssub.s32 128, 128
      %46 = vsyncadd [#allocation6], %s45
      %s48 = sshll.u32 [#allocation7], 4
      %s49 = int_to_ptr.vmem [resolvable:$true] %s48
      %51 = dma.hbm_to_vmem [thread:$0]  %s2, 128, %s49, [#allocation6]
    $region13: #{tpu_custom_call.1} parent=1 // pred_fallthru
      _
    // Predicated region
    $region14: #{tpu_custom_call.1} parent=1 // pred_check
      _
    $region15: #{tpu_custom_call.1} parent=1 // pred_check_branch
      %53 = sbr.rel (0) target = $region17
    $region16: #{tpu_custom_call.1} parent=1 // pred_region
      %s55 = ssub.s32 2048, 2048
      %56 = vsyncadd [#allocation9], %s55
      %s57 = sshll.u32 [#allocation8], 4
      %s58 = int_to_ptr.vmem [resolvable:$true] %s57
      %63 = dma.hbm_to_vmem [thread:$0]  %s3, 2048, %s58, [#allocation9], 64, 64, 4
    $region17: #{tpu_custom_call.1} parent=1 // pred_fallthru
      _
    // Predicated region
    $region18: #{tpu_custom_call.1} parent=1 // pred_check
      _
    $region19: #{tpu_custom_call.1} parent=1 // pred_check_branch
      %65 = sbr.rel (0) target = $region21
    $region20: #{tpu_custom_call.1} parent=1 // pred_region
      _
    $region21: #{tpu_custom_call.1} parent=1 // pred_fallthru
      _
    // Predicated region
    $region22: #{tpu_custom_call.1} parent=1 // pred_check
      _
    $region23: #{tpu_custom_call.1} parent=1 // pred_check_branch
      %67 = sbr.rel (0) target = $region25
    $region24: #{tpu_custom_call.1} parent=1 // pred_region
      %s69 = ssub.s32 2048, 2048
      %70 = vsyncadd [#allocation9], %s69
      %s71 = sshll.u32 [#allocation10], 4
      %s72 = int_to_ptr.vmem [resolvable:$true] %s71
      %77 = dma.hbm_to_vmem [thread:$0]  %s5, 2048, %s72, [#allocation9], 128, 128, 8
    $region25: #{tpu_custom_call.1} parent=1 // pred_fallthru
      _
    // Predicated region
    $region26: #{tpu_custom_call.1} parent=1 // pred_check
      _
    $region27: #{tpu_custom_call.1} parent=1 // pred_check_branch
      %79 = sbr.rel (0) target = $region29
    $region28: #{tpu_custom_call.1} parent=1 // pred_region
      _
    $region29: #{tpu_custom_call.1} parent=1 // pred_fallthru
      _
    // Predicated region
    $region30: #{tpu_custom_call.1} parent=1 // pred_check
      _
    $region31: #{tpu_custom_call.1} parent=1 // pred_check_branch
      %81 = sbr.rel (0) target = $region33
    $region32: #{tpu_custom_call.1} parent=1 // pred_region
      %s83 = ssub.s32 4096, 4096
      %84 = vsyncadd [#allocation12], %s83
      %s85 = sshll.u32 [#allocation11], 4
      %s86 = int_to_ptr.vmem [resolvable:$true] %s85
      %91 = dma.hbm_to_vmem [thread:$0]  %s7, 4096, %s86, [#allocation12], 128, 128, 8
    $region33: #{tpu_custom_call.1} parent=1 // pred_fallthru
      _
    // Predicated region
    $region34: #{tpu_custom_call.1} parent=1 // pred_check
      _
    $region35: #{tpu_custom_call.1} parent=1 // pred_check_branch
      %93 = sbr.rel (0) target = $region37
    $region36: #{tpu_custom_call.1} parent=1 // pred_region
      _
    $region37: #{tpu_custom_call.1} parent=1 // pred_fallthru
      _
    // Predicated region
    $region38: #{tpu_custom_call.1} parent=1 // pred_check
      _
    $region39: #{tpu_custom_call.1} parent=1 // pred_check_branch
      %95 = sbr.rel (0) target = $region41
    $region40: #{tpu_custom_call.1} parent=1 // pred_region
      %96 = dma.done [#allocation3], 128
    $region41: #{tpu_custom_call.1} parent=1 // pred_fallthru
      _
    // Predicated region
    $region42: #{tpu_custom_call.1} parent=1 // pred_check
      _
    $region43: #{tpu_custom_call.1} parent=1 // pred_check_branch
      %98 = sbr.rel (0) target = $region45
    $region44: #{tpu_custom_call.1} parent=1 // pred_region
      %99 = dma.done [#allocation6], 128
    $region45: #{tpu_custom_call.1} parent=1 // pred_fallthru
      _
    // Predicated region
    $region46: #{tpu_custom_call.1} parent=1 // pred_check
      _
    $region47: #{tpu_custom_call.1} parent=1 // pred_check_branch
      %101 = sbr.rel (0) target = $region49
    $region48: #{tpu_custom_call.1} parent=1 // pred_region
      %102 = dma.done [#allocation6], 128
    $region49: #{tpu_custom_call.1} parent=1 // pred_fallthru
      _
    // Predicated region
    $region50: #{tpu_custom_call.1} parent=1 // pred_check
      _
    $region51: #{tpu_custom_call.1} parent=1 // pred_check_branch
      %104 = sbr.rel (0) target = $region53
    $region52: #{tpu_custom_call.1} parent=1 // pred_region
      %105 = dma.done [#allocation9], 2048
    $region53: #{tpu_custom_call.1} parent=1 // pred_fallthru
      _
    // Predicated region
    $region54: #{tpu_custom_call.1} parent=1 // pred_check
      _
    $region55: #{tpu_custom_call.1} parent=1 // pred_check_branch
      %107 = sbr.rel (0) target = $region57
    $region56: #{tpu_custom_call.1} parent=1 // pred_region
      %108 = dma.done [#allocation9], 2048
    $region57: #{tpu_custom_call.1} parent=1 // pred_fallthru
      _
    // Predicated region
    $region58: #{tpu_custom_call.1} parent=1 // pred_check
      _
    $region59: #{tpu_custom_call.1} parent=1 // pred_check_branch
      %110 = sbr.rel (0) target = $region61
    $region60: #{tpu_custom_call.1} parent=1 // pred_region
      %111 = dma.done [#allocation12], 4096
    $region61: #{tpu_custom_call.1} parent=1 // pred_fallthru
      _
    %v113 = vlaneseq
    %v114 = vand.u32 %v113, 127
    %vm115 = vcmp.lt.s32.totalorder %v114, 10
    %v116 = vld [vmem:[#allocation2] sm:$0xff]
    %v117 = vld [vmem:[#allocation8] sm:$0xf]
    %v118 = vld [vmem:[#allocation8 + $0x4] sm:$0xf]
    %v119 = vld [vmem:[#allocation8 + $0x8] sm:$0xf]
    %v120 = vld [vmem:[#allocation8 + $0xc] sm:$0xf]
    %v121 = vld [vmem:[#allocation8 + $0x10] sm:$0xf]
    %v122 = vld [vmem:[#allocation8 + $0x14] sm:$0xf]
    %v123 = vld [vmem:[#allocation8 + $0x18] sm:$0xf]
    %v124 = vld [vmem:[#allocation8 + $0x1c] sm:$0xf]
    %v125 = vld [vmem:[#allocation8 + $0x20] sm:$0xf]
    %v126 = vld [vmem:[#allocation8 + $0x24] sm:$0xf]
    %v127 = vld [vmem:[#allocation8 + $0x28] sm:$0xf]
    %v128 = vld [vmem:[#allocation8 + $0x2c] sm:$0xf]
    %v129 = vld [vmem:[#allocation8 + $0x30] sm:$0xf]
    %v130 = vld [vmem:[#allocation8 + $0x34] sm:$0xf]
    %v131 = vld [vmem:[#allocation8 + $0x38] sm:$0xf]
    %v132 = vld [vmem:[#allocation8 + $0x3c] sm:$0xf]
    %v133 = vld [vmem:[#allocation8 + $0x40] sm:$0xf]
    %v134 = vld [vmem:[#allocation8 + $0x44] sm:$0xf]
    %v135 = vld [vmem:[#allocation8 + $0x48] sm:$0xf]
    %v136 = vld [vmem:[#allocation8 + $0x4c] sm:$0xf]
    %v137 = vld [vmem:[#allocation8 + $0x50] sm:$0xf]
    %v138 = vld [vmem:[#allocation8 + $0x54] sm:$0xf]
    %v139 = vld [vmem:[#allocation8 + $0x58] sm:$0xf]
    %v140 = vld [vmem:[#allocation8 + $0x5c] sm:$0xf]
    %v141 = vld [vmem:[#allocation8 + $0x60] sm:$0xf]
    %v142 = vld [vmem:[#allocation8 + $0x64] sm:$0xf]
    %v143 = vld [vmem:[#allocation8 + $0x68] sm:$0xf]
    %v144 = vld [vmem:[#allocation8 + $0x6c] sm:$0xf]
    %v145 = vld [vmem:[#allocation8 + $0x70] sm:$0xf]
    %v146 = vld [vmem:[#allocation8 + $0x74] sm:$0xf]
    %v147 = vld [vmem:[#allocation8 + $0x78] sm:$0xf]
    %v148 = vld [vmem:[#allocation8 + $0x7c] sm:$0xf]
    %v149 = vld [vmem:[%s4] sm:$0x1]
    %v151 = vlaneseq
    %v152 = vshrl.u32 %v151, 7
    %v153 = vsub.s32 0, %v152
    %v154 = vrot.slane %v149, %v153
    %v157 = vunpack.c.l.b16 %v116
    %v158 = vunpack.c.h.b16 %v116
    %v159 = vpack.c.b16 %v157, %v157
    %v160 = vpack.c.b16 %v158, %v158
    %v195 = vunpack.c.l.b16 %v117
    %v196 = vunpack.c.l.b16 %v118
    %v197 = vunpack.c.l.b16 %v119
    %v198 = vunpack.c.l.b16 %v120
    %v199 = vunpack.c.l.b16 %v121
    %v200 = vunpack.c.l.b16 %v122
    %v201 = vunpack.c.l.b16 %v123
    %v202 = vunpack.c.l.b16 %v124
    %v203 = vunpack.c.l.b16 %v125
    %v204 = vunpack.c.l.b16 %v126
    %v205 = vunpack.c.l.b16 %v127
    %v206 = vunpack.c.l.b16 %v128
    %v207 = vunpack.c.l.b16 %v129
    %v208 = vunpack.c.l.b16 %v130
    %v209 = vunpack.c.l.b16 %v131
    %v210 = vunpack.c.l.b16 %v132
    %v211 = vunpack.c.l.b16 %v133
    %v212 = vunpack.c.l.b16 %v134
    %v213 = vunpack.c.l.b16 %v135
    %v214 = vunpack.c.l.b16 %v136
    %v215 = vunpack.c.l.b16 %v137
    %v216 = vunpack.c.l.b16 %v138
    %v217 = vunpack.c.l.b16 %v139
    %v218 = vunpack.c.l.b16 %v140
    %v219 = vunpack.c.l.b16 %v141
    %v220 = vunpack.c.l.b16 %v142
    %v221 = vunpack.c.l.b16 %v143
    %v222 = vunpack.c.l.b16 %v144
    %v223 = vunpack.c.l.b16 %v145
    %v224 = vunpack.c.l.b16 %v146
    %v225 = vunpack.c.l.b16 %v147
    %v226 = vunpack.c.l.b16 %v148
    %v227 = vpack.c.b16 %v196, %v195
    %v228 = vpack.c.b16 %v198, %v197
    %v229 = vpack.c.b16 %v200, %v199
    %v230 = vpack.c.b16 %v202, %v201
    %v231 = vpack.c.b16 %v204, %v203
    %v232 = vpack.c.b16 %v206, %v205
    %v233 = vpack.c.b16 %v208, %v207
    %v234 = vpack.c.b16 %v210, %v209
    %v235 = vpack.c.b16 %v212, %v211
    %v236 = vpack.c.b16 %v214, %v213
    %v237 = vpack.c.b16 %v216, %v215
    %v238 = vpack.c.b16 %v218, %v217
    %v239 = vpack.c.b16 %v220, %v219
    %v240 = vpack.c.b16 %v222, %v221
    %v241 = vpack.c.b16 %v224, %v223
    %v242 = vpack.c.b16 %v226, %v225
    %259 = vmatprep.subr.bf16.mxu0 0
    %260 = vmatpush1.bf16.msra.mxu0 %v227
    %261 = vmatprep.subr.bf16.mxu0 0
    %262 = vmatpush1.bf16.msra.mxu0 %v228
    %263 = vmatprep.subr.bf16.mxu0 0
    %264 = vmatpush1.bf16.msra.mxu0 %v229
    %265 = vmatprep.subr.bf16.mxu0 0
    %266 = vmatpush1.bf16.msra.mxu0 %v230
    %267 = vmatprep.subr.bf16.mxu0 0
    %268 = vmatpush1.bf16.msra.mxu0 %v231
    %269 = vmatprep.subr.bf16.mxu0 0
    %270 = vmatpush1.bf16.msra.mxu0 %v232
    %271 = vmatprep.subr.bf16.mxu0 0
    %272 = vmatpush1.bf16.msra.mxu0 %v233
    %273 = vmatprep.subr.bf16.mxu0 0
    %274 = vmatpush1.bf16.msra.mxu0 %v234
    %275 = vmatprep.subr.bf16.mxu0 0
    %276 = vmatpush1.bf16.msra.mxu0 %v235
    %277 = vmatprep.subr.bf16.mxu0 0
    %278 = vmatpush1.bf16.msra.mxu0 %v236
    %279 = vmatprep.subr.bf16.mxu0 0
    %280 = vmatpush1.bf16.msra.mxu0 %v237
    %281 = vmatprep.subr.bf16.mxu0 0
    %282 = vmatpush1.bf16.msra.mxu0 %v238
    %283 = vmatprep.subr.bf16.mxu0 0
    %284 = vmatpush1.bf16.msra.mxu0 %v239
    %285 = vmatprep.subr.bf16.mxu0 0
    %286 = vmatpush1.bf16.msra.mxu0 %v240
    %287 = vmatprep.subr.bf16.mxu0 0
    %288 = vmatpush1.bf16.msra.mxu0 %v241
    %289 = vmatprep.subr.bf16.mxu0 0
    %290 = vmatpush1.bf16.msra.mxu0 %v242
    %291 = vmatprep.mubr.bf16.mxu0 %v160
    %292 = vmatmul.mubr.bf16.gmra.mrb[0].mxu0 %v159
    %v293 = vpop.f32.mrb[0].mxu0
    %v294 = vadd.f32 %v154, %v293
    %v295 = vpop.f32.mrb[0].mxu0
    %v296 = vpop.f32.mrb[0].mxu0
    %v297 = vpop.f32.mrb[0].mxu0
    %298 = vdwg.mxu0
    %v299 = vmax.f32 %v294, 0.0
    %v300 = vpack.c.bf16 %v299, %v299
    %v301 = vld [vmem:[#allocation10] sm:$0xff]
    %v302 = vld [vmem:[#allocation10 + $0x8] sm:$0xff]
    %v303 = vld [vmem:[#allocation10 + $0x10] sm:$0xff]
    %v304 = vld [vmem:[#allocation10 + $0x18] sm:$0xff]
    %v305 = vld [vmem:[#allocation10 + $0x20] sm:$0xff]
    %v306 = vld [vmem:[#allocation10 + $0x28] sm:$0xff]
    %v307 = vld [vmem:[#allocation10 + $0x30] sm:$0xff]
    %v308 = vld [vmem:[#allocation10 + $0x38] sm:$0xff]
    %v309 = vld [vmem:[#allocation10 + $0x40] sm:$0xff]
    %v310 = vld [vmem:[#allocation10 + $0x48] sm:$0xff]
    %v311 = vld [vmem:[#allocation10 + $0x50] sm:$0xff]
    %v312 = vld [vmem:[#allocation10 + $0x58] sm:$0xff]
    %v313 = vld [vmem:[#allocation10 + $0x60] sm:$0xff]
    %v314 = vld [vmem:[#allocation10 + $0x68] sm:$0xff]
    %v315 = vld [vmem:[#allocation10 + $0x70] sm:$0xff]
    %v316 = vld [vmem:[#allocation10 + $0x78] sm:$0xff]
    %v317 = vld [vmem:[%s6] sm:$0x3]
    %v319 = vlaneseq
    %v320 = vshrl.u32 %v319, 7
    %v321 = vsub.s32 0, %v320
    %v322 = vrot.slane %v317, %v321
    %v323 = vlaneseq
    %v324 = vshrl.u32 %v323, 7
    %v325 = vsub.s32 1, %v324
    %v326 = vrot.slane %v317, %v325
    %v345 = vunpack.c.l.b16 %v301
    %v346 = vunpack.c.h.b16 %v301
    %v347 = vunpack.c.l.b16 %v302
    %v348 = vunpack.c.h.b16 %v302
    %v349 = vunpack.c.l.b16 %v303
    %v350 = vunpack.c.h.b16 %v303
    %v351 = vunpack.c.l.b16 %v304
    %v352 = vunpack.c.h.b16 %v304
    %v353 = vunpack.c.l.b16 %v305
    %v354 = vunpack.c.h.b16 %v305
    %v355 = vunpack.c.l.b16 %v306
    %v356 = vunpack.c.h.b16 %v306
    %v357 = vunpack.c.l.b16 %v307
    %v358 = vunpack.c.h.b16 %v307
    %v359 = vunpack.c.l.b16 %v308
    %v360 = vunpack.c.h.b16 %v308
    %v361 = vunpack.c.l.b16 %v309
    %v362 = vunpack.c.h.b16 %v309
    %v363 = vunpack.c.l.b16 %v310
    %v364 = vunpack.c.h.b16 %v310
    %v365 = vunpack.c.l.b16 %v311
    %v366 = vunpack.c.h.b16 %v311
    %v367 = vunpack.c.l.b16 %v312
    %v368 = vunpack.c.h.b16 %v312
    %v369 = vunpack.c.l.b16 %v313
    %v370 = vunpack.c.h.b16 %v313
    %v371 = vunpack.c.l.b16 %v314
    %v372 = vunpack.c.h.b16 %v314
    %v373 = vunpack.c.l.b16 %v315
    %v374 = vunpack.c.h.b16 %v315
    %v375 = vunpack.c.l.b16 %v316
    %v376 = vunpack.c.h.b16 %v316
    %v377 = vpack.c.b16 %v347, %v345
    %v378 = vpack.c.b16 %v348, %v346
    %v379 = vpack.c.b16 %v351, %v349
    %v380 = vpack.c.b16 %v352, %v350
    %v381 = vpack.c.b16 %v355, %v353
    %v382 = vpack.c.b16 %v356, %v354
    %v383 = vpack.c.b16 %v359, %v357
    %v384 = vpack.c.b16 %v360, %v358
    %v385 = vpack.c.b16 %v363, %v361
    %v386 = vpack.c.b16 %v364, %v362
    %v387 = vpack.c.b16 %v367, %v365
    %v388 = vpack.c.b16 %v368, %v366
    %v389 = vpack.c.b16 %v371, %v369
    %v390 = vpack.c.b16 %v372, %v370
    %v391 = vpack.c.b16 %v375, %v373
    %v392 = vpack.c.b16 %v376, %v374
    %409 = vmatprep.subr.bf16.mxu0 %v378
    %410 = vmatpush1.bf16.msra.mxu0 %v377
    %411 = vmatprep.subr.bf16.mxu0 %v380
    %412 = vmatpush1.bf16.msra.mxu0 %v379
    %413 = vmatprep.subr.bf16.mxu0 %v382
    %414 = vmatpush1.bf16.msra.mxu0 %v381
    %415 = vmatprep.subr.bf16.mxu0 %v384
    %416 = vmatpush1.bf16.msra.mxu0 %v383
    %417 = vmatprep.subr.bf16.mxu0 %v386
    %418 = vmatpush1.bf16.msra.mxu0 %v385
    %419 = vmatprep.subr.bf16.mxu0 %v388
    %420 = vmatpush1.bf16.msra.mxu0 %v387
    %421 = vmatprep.subr.bf16.mxu0 %v390
    %422 = vmatpush1.bf16.msra.mxu0 %v389
    %423 = vmatprep.subr.bf16.mxu0 %v392
    %424 = vmatpush1.bf16.msra.mxu0 %v391
    %425 = vmatprep.subr.bf16.mxu0 0
    %426 = vmatpush1.bf16.msra.mxu0 0
    %427 = vmatprep.subr.bf16.mxu0 0
    %428 = vmatpush1.bf16.msra.mxu0 0
    %429 = vmatprep.subr.bf16.mxu0 0
    %430 = vmatpush1.bf16.msra.mxu0 0
    %431 = vmatprep.subr.bf16.mxu0 0
    %432 = vmatpush1.bf16.msra.mxu0 0
    %433 = vmatprep.subr.bf16.mxu0 0
    %434 = vmatpush1.bf16.msra.mxu0 0
    %435 = vmatprep.subr.bf16.mxu0 0
    %436 = vmatpush1.bf16.msra.mxu0 0
    %437 = vmatprep.subr.bf16.mxu0 0
    %438 = vmatpush1.bf16.msra.mxu0 0
    %439 = vmatprep.subr.bf16.mxu0 0
    %440 = vmatpush1.bf16.msra.mxu0 0
    %441 = vmatprep.mubr.bf16.mxu0 0
    %442 = vmatmul.mubr.bf16.gmra.mrb[0].mxu0 %v300
    %v443 = vpop.f32.mrb[0].mxu0
    %v444 = vadd.f32 %v322, %v443
    %v445 = vpop.f32.mrb[0].mxu0
    %v446 = vadd.f32 %v326, %v445
    %v447 = vpop.f32.mrb[0].mxu0
    %v448 = vpop.f32.mrb[0].mxu0
    %449 = vdwg.mxu0
    %v450 = vmax.f32 %v444, 0.0
    %v451 = vmax.f32 %v446, 0.0
    %v452 = vpack.c.bf16 %v450, %v450
    %v453 = vpack.c.bf16 %v451, %v451
    %v454 = vld [vmem:[#allocation11] sm:$0xff]
    %v455 = vld [vmem:[#allocation11 + $0x8] sm:$0xff]
    %v456 = vld [vmem:[#allocation11 + $0x10] sm:$0xff]
    %v457 = vld [vmem:[#allocation11 + $0x18] sm:$0xff]
    %v458 = vld [vmem:[#allocation11 + $0x20] sm:$0xff]
    %v459 = vld [vmem:[#allocation11 + $0x28] sm:$0xff]
    %v460 = vld [vmem:[#allocation11 + $0x30] sm:$0xff]
    %v461 = vld [vmem:[#allocation11 + $0x38] sm:$0xff]
    %v462 = vld [vmem:[#allocation11 + $0x40] sm:$0xff]
    %v463 = vld [vmem:[#allocation11 + $0x48] sm:$0xff]
    %v464 = vld [vmem:[#allocation11 + $0x50] sm:$0xff]
    %v465 = vld [vmem:[#allocation11 + $0x58] sm:$0xff]
    %v466 = vld [vmem:[#allocation11 + $0x60] sm:$0xff]
    %v467 = vld [vmem:[#allocation11 + $0x68] sm:$0xff]
    %v468 = vld [vmem:[#allocation11 + $0x70] sm:$0xff]
    %v469 = vld [vmem:[#allocation11 + $0x78] sm:$0xff]
    %v470 = vld [vmem:[#allocation11 + $0x80] sm:$0xff]
    %v471 = vld [vmem:[#allocation11 + $0x88] sm:$0xff]
    %v472 = vld [vmem:[#allocation11 + $0x90] sm:$0xff]
    %v473 = vld [vmem:[#allocation11 + $0x98] sm:$0xff]
    %v474 = vld [vmem:[#allocation11 + $0xa0] sm:$0xff]
    %v475 = vld [vmem:[#allocation11 + $0xa8] sm:$0xff]
    %v476 = vld [vmem:[#allocation11 + $0xb0] sm:$0xff]
    %v477 = vld [vmem:[#allocation11 + $0xb8] sm:$0xff]
    %v478 = vld [vmem:[#allocation11 + $0xc0] sm:$0xff]
    %v479 = vld [vmem:[#allocation11 + $0xc8] sm:$0xff]
    %v480 = vld [vmem:[#allocation11 + $0xd0] sm:$0xff]
    %v481 = vld [vmem:[#allocation11 + $0xd8] sm:$0xff]
    %v482 = vld [vmem:[#allocation11 + $0xe0] sm:$0xff]
    %v483 = vld [vmem:[#allocation11 + $0xe8] sm:$0xff]
    %v484 = vld [vmem:[#allocation11 + $0xf0] sm:$0xff]
    %v485 = vld [vmem:[#allocation11 + $0xf8] sm:$0xff]
    %v486 = vld [vmem:[%s8] sm:$0x3]
    %v488 = vlaneseq
    %v489 = vshrl.u32 %v488, 7
    %v490 = vsub.s32 0, %v489
    %v491 = vrot.slane %v486, %v490
    %v492 = vlaneseq
    %v493 = vshrl.u32 %v492, 7
    %v494 = vsub.s32 1, %v493
    %v495 = vrot.slane %v486, %v494
    %v530 = vunpack.c.l.b16 %v454
    %v531 = vunpack.c.h.b16 %v454
    %v532 = vunpack.c.l.b16 %v455
    %v533 = vunpack.c.h.b16 %v455
    %v534 = vunpack.c.l.b16 %v456
    %v535 = vunpack.c.h.b16 %v456
    %v536 = vunpack.c.l.b16 %v457
    %v537 = vunpack.c.h.b16 %v457
    %v538 = vunpack.c.l.b16 %v458
    %v539 = vunpack.c.h.b16 %v458
    %v540 = vunpack.c.l.b16 %v459
    %v541 = vunpack.c.h.b16 %v459
    %v542 = vunpack.c.l.b16 %v460
    %v543 = vunpack.c.h.b16 %v460
    %v544 = vunpack.c.l.b16 %v461
    %v545 = vunpack.c.h.b16 %v461
    %v546 = vunpack.c.l.b16 %v462
    %v547 = vunpack.c.h.b16 %v462
    %v548 = vunpack.c.l.b16 %v463
    %v549 = vunpack.c.h.b16 %v463
    %v550 = vunpack.c.l.b16 %v464
    %v551 = vunpack.c.h.b16 %v464
    %v552 = vunpack.c.l.b16 %v465
    %v553 = vunpack.c.h.b16 %v465
    %v554 = vunpack.c.l.b16 %v466
    %v555 = vunpack.c.h.b16 %v466
    %v556 = vunpack.c.l.b16 %v467
    %v557 = vunpack.c.h.b16 %v467
    %v558 = vunpack.c.l.b16 %v468
    %v559 = vunpack.c.h.b16 %v468
    %v560 = vunpack.c.l.b16 %v469
    %v561 = vunpack.c.h.b16 %v469
    %v562 = vunpack.c.l.b16 %v470
    %v563 = vunpack.c.h.b16 %v470
    %v564 = vunpack.c.l.b16 %v471
    %v565 = vunpack.c.h.b16 %v471
    %v566 = vunpack.c.l.b16 %v472
    %v567 = vunpack.c.h.b16 %v472
    %v568 = vunpack.c.l.b16 %v473
    %v569 = vunpack.c.h.b16 %v473
    %v570 = vunpack.c.l.b16 %v474
    %v571 = vunpack.c.h.b16 %v474
    %v572 = vunpack.c.l.b16 %v475
    %v573 = vunpack.c.h.b16 %v475
    %v574 = vunpack.c.l.b16 %v476
    %v575 = vunpack.c.h.b16 %v476
    %v576 = vunpack.c.l.b16 %v477
    %v577 = vunpack.c.h.b16 %v477
    %v578 = vunpack.c.l.b16 %v478
    %v579 = vunpack.c.h.b16 %v478
    %v580 = vunpack.c.l.b16 %v479
    %v581 = vunpack.c.h.b16 %v479
    %v582 = vunpack.c.l.b16 %v480
    %v583 = vunpack.c.h.b16 %v480
    %v584 = vunpack.c.l.b16 %v481
    %v585 = vunpack.c.h.b16 %v481
    %v586 = vunpack.c.l.b16 %v482
    %v587 = vunpack.c.h.b16 %v482
    %v588 = vunpack.c.l.b16 %v483
    %v589 = vunpack.c.h.b16 %v483
    %v590 = vunpack.c.l.b16 %v484
    %v591 = vunpack.c.h.b16 %v484
    %v592 = vunpack.c.l.b16 %v485
    %v593 = vunpack.c.h.b16 %v485
    %v594 = vpack.c.b16 %v532, %v530
    %v595 = vpack.c.b16 %v533, %v531
    %v596 = vpack.c.b16 %v536, %v534
    %v597 = vpack.c.b16 %v537, %v535
    %v598 = vpack.c.b16 %v540, %v538
    %v599 = vpack.c.b16 %v541, %v539
    %v600 = vpack.c.b16 %v544, %v542
    %v601 = vpack.c.b16 %v545, %v543
    %v602 = vpack.c.b16 %v548, %v546
    %v603 = vpack.c.b16 %v549, %v547
    %v604 = vpack.c.b16 %v552, %v550
    %v605 = vpack.c.b16 %v553, %v551
    %v606 = vpack.c.b16 %v556, %v554
    %v607 = vpack.c.b16 %v557, %v555
    %v608 = vpack.c.b16 %v560, %v558
    %v609 = vpack.c.b16 %v561, %v559
    %v610 = vpack.c.b16 %v564, %v562
    %v611 = vpack.c.b16 %v565, %v563
    %v612 = vpack.c.b16 %v568, %v566
    %v613 = vpack.c.b16 %v569, %v567
    %v614 = vpack.c.b16 %v572, %v570
    %v615 = vpack.c.b16 %v573, %v571
    %v616 = vpack.c.b16 %v576, %v574
    %v617 = vpack.c.b16 %v577, %v575
    %v618 = vpack.c.b16 %v580, %v578
    %v619 = vpack.c.b16 %v581, %v579
    %v620 = vpack.c.b16 %v584, %v582
    %v621 = vpack.c.b16 %v585, %v583
    %v622 = vpack.c.b16 %v588, %v586
    %v623 = vpack.c.b16 %v589, %v587
    %v624 = vpack.c.b16 %v592, %v590
    %v625 = vpack.c.b16 %v593, %v591
    %658 = vmatprep.subr.bf16.mxu0 %v595
    %659 = vmatpush1.bf16.msra.mxu0 %v594
    %660 = vmatprep.subr.bf16.mxu0 %v597
    %661 = vmatpush1.bf16.msra.mxu0 %v596
    %662 = vmatprep.subr.bf16.mxu0 %v599
    %663 = vmatpush1.bf16.msra.mxu0 %v598
    %664 = vmatprep.subr.bf16.mxu0 %v601
    %665 = vmatpush1.bf16.msra.mxu0 %v600
    %666 = vmatprep.subr.bf16.mxu0 %v603
    %667 = vmatpush1.bf16.msra.mxu0 %v602
    %668 = vmatprep.subr.bf16.mxu0 %v605
    %669 = vmatpush1.bf16.msra.mxu0 %v604
    %670 = vmatprep.subr.bf16.mxu0 %v607
    %671 = vmatpush1.bf16.msra.mxu0 %v606
    %672 = vmatprep.subr.bf16.mxu0 %v609
    %673 = vmatpush1.bf16.msra.mxu0 %v608
    %674 = vmatprep.subr.bf16.mxu0 %v611
    %675 = vmatpush1.bf16.msra.mxu0 %v610
    %676 = vmatprep.subr.bf16.mxu0 %v613
    %677 = vmatpush1.bf16.msra.mxu0 %v612
    %678 = vmatprep.subr.bf16.mxu0 %v615
    %679 = vmatpush1.bf16.msra.mxu0 %v614
    %680 = vmatprep.subr.bf16.mxu0 %v617
    %681 = vmatpush1.bf16.msra.mxu0 %v616
    %682 = vmatprep.subr.bf16.mxu0 %v619
    %683 = vmatpush1.bf16.msra.mxu0 %v618
    %684 = vmatprep.subr.bf16.mxu0 %v621
    %685 = vmatpush1.bf16.msra.mxu0 %v620
    %686 = vmatprep.subr.bf16.mxu0 %v623
    %687 = vmatpush1.bf16.msra.mxu0 %v622
    %688 = vmatprep.subr.bf16.mxu0 %v625
    %689 = vmatpush1.bf16.msra.mxu0 %v624
    %690 = vmatprep.mubr.bf16.mxu0 %v453
    %691 = vmatmul.mubr.bf16.gmra.mrb[0].mxu0 %v452
    %v692 = vpop.f32.mrb[0].mxu0
    %v693 = vadd.f32 %v491, %v692
    %v694 = vpop.f32.mrb[0].mxu0
    %v695 = vadd.f32 %v495, %v694
    %v696 = vpop.f32.mrb[0].mxu0
    %v697 = vpop.f32.mrb[0].mxu0
    %698 = vdwg.mxu0
    %v699 = vmul.f32 %v693, %v693
    %700 = vadd.xlane.f32.xlu0 %v699
    %v701 = vpop.xlane.xlu0 %700
    %v702 = vmax.f32 %v701, 1e-24
    %v703 = vrsqrt.pop %v702
    %v704 = vmul.f32 %v693, %v703
    %705 = vst [vmem:[#allocation13] sm:$0xff] %v704
    %v706 = vsel %vm115, 1, 0
    %vm707 = vcmp.eq.s32.totalorder %v706, 1
    %v708 = vsel %vm707, %v695, -inf
    %709 = vmax.xlane.f32.xlu0 %v708
    %v710 = vpop.xlane.xlu0 %709
    %v711 = vsub.f32 %v695, %v710
    %v712 = vmul.f32 %v711, 1.442695
    %v713 = vpow.pop %v712
    %v714 = vsel %vm707, %v713, 0.0
    %715 = vadd.xlane.f32.xlu0 %v714
    %v716 = vpop.xlane.xlu0 %715
    %v717 = vrcp.pop %v716
    %v718 = vmul.f32 %v714, %v717
    %719 = vst [vmem:[#allocation14] sm:$0xff] %v718
    %v720 = vld [vmem:[#allocation5] sm:$0xff]
    %v721 = vld [vmem:[#allocation8] sm:$0xf]
    %v722 = vld [vmem:[#allocation8 + $0x4] sm:$0xf]
    %v723 = vld [vmem:[#allocation8 + $0x8] sm:$0xf]
    %v724 = vld [vmem:[#allocation8 + $0xc] sm:$0xf]
    %v725 = vld [vmem:[#allocation8 + $0x10] sm:$0xf]
    %v726 = vld [vmem:[#allocation8 + $0x14] sm:$0xf]
    %v727 = vld [vmem:[#allocation8 + $0x18] sm:$0xf]
    %v728 = vld [vmem:[#allocation8 + $0x1c] sm:$0xf]
    %v729 = vld [vmem:[#allocation8 + $0x20] sm:$0xf]
    %v730 = vld [vmem:[#allocation8 + $0x24] sm:$0xf]
    %v731 = vld [vmem:[#allocation8 + $0x28] sm:$0xf]
    %v732 = vld [vmem:[#allocation8 + $0x2c] sm:$0xf]
    %v733 = vld [vmem:[#allocation8 + $0x30] sm:$0xf]
    %v734 = vld [vmem:[#allocation8 + $0x34] sm:$0xf]
    %v735 = vld [vmem:[#allocation8 + $0x38] sm:$0xf]
    %v736 = vld [vmem:[#allocation8 + $0x3c] sm:$0xf]
    %v737 = vld [vmem:[#allocation8 + $0x40] sm:$0xf]
    %v738 = vld [vmem:[#allocation8 + $0x44] sm:$0xf]
    %v739 = vld [vmem:[#allocation8 + $0x48] sm:$0xf]
    %v740 = vld [vmem:[#allocation8 + $0x4c] sm:$0xf]
    %v741 = vld [vmem:[#allocation8 + $0x50] sm:$0xf]
    %v742 = vld [vmem:[#allocation8 + $0x54] sm:$0xf]
    %v743 = vld [vmem:[#allocation8 + $0x58] sm:$0xf]
    %v744 = vld [vmem:[#allocation8 + $0x5c] sm:$0xf]
    %v745 = vld [vmem:[#allocation8 + $0x60] sm:$0xf]
    %v746 = vld [vmem:[#allocation8 + $0x64] sm:$0xf]
    %v747 = vld [vmem:[#allocation8 + $0x68] sm:$0xf]
    %v748 = vld [vmem:[#allocation8 + $0x6c] sm:$0xf]
    %v749 = vld [vmem:[#allocation8 + $0x70] sm:$0xf]
    %v750 = vld [vmem:[#allocation8 + $0x74] sm:$0xf]
    %v751 = vld [vmem:[#allocation8 + $0x78] sm:$0xf]
    %v752 = vld [vmem:[#allocation8 + $0x7c] sm:$0xf]
    %v753 = vld [vmem:[%s4] sm:$0x1]
    %v755 = vlaneseq
    %v756 = vshrl.u32 %v755, 7
    %v757 = vsub.s32 0, %v756
    %v758 = vrot.slane %v753, %v757
    %v761 = vunpack.c.l.b16 %v720
    %v762 = vunpack.c.h.b16 %v720
    %v763 = vpack.c.b16 %v761, %v761
    %v764 = vpack.c.b16 %v762, %v762
    %v799 = vunpack.c.l.b16 %v721
    %v800 = vunpack.c.l.b16 %v722
    %v801 = vunpack.c.l.b16 %v723
    %v802 = vunpack.c.l.b16 %v724
    %v803 = vunpack.c.l.b16 %v725
    %v804 = vunpack.c.l.b16 %v726
    %v805 = vunpack.c.l.b16 %v727
    %v806 = vunpack.c.l.b16 %v728
    %v807 = vunpack.c.l.b16 %v729
    %v808 = vunpack.c.l.b16 %v730
    %v809 = vunpack.c.l.b16 %v731
    %v810 = vunpack.c.l.b16 %v732
    %v811 = vunpack.c.l.b16 %v733
    %v812 = vunpack.c.l.b16 %v734
    %v813 = vunpack.c.l.b16 %v735
    %v814 = vunpack.c.l.b16 %v736
    %v815 = vunpack.c.l.b16 %v737
    %v816 = vunpack.c.l.b16 %v738
    %v817 = vunpack.c.l.b16 %v739
    %v818 = vunpack.c.l.b16 %v740
    %v819 = vunpack.c.l.b16 %v741
    %v820 = vunpack.c.l.b16 %v742
    %v821 = vunpack.c.l.b16 %v743
    %v822 = vunpack.c.l.b16 %v744
    %v823 = vunpack.c.l.b16 %v745
    %v824 = vunpack.c.l.b16 %v746
    %v825 = vunpack.c.l.b16 %v747
    %v826 = vunpack.c.l.b16 %v748
    %v827 = vunpack.c.l.b16 %v749
    %v828 = vunpack.c.l.b16 %v750
    %v829 = vunpack.c.l.b16 %v751
    %v830 = vunpack.c.l.b16 %v752
    %v831 = vpack.c.b16 %v800, %v799
    %v832 = vpack.c.b16 %v802, %v801
    %v833 = vpack.c.b16 %v804, %v803
    %v834 = vpack.c.b16 %v806, %v805
    %v835 = vpack.c.b16 %v808, %v807
    %v836 = vpack.c.b16 %v810, %v809
    %v837 = vpack.c.b16 %v812, %v811
    %v838 = vpack.c.b16 %v814, %v813
    %v839 = vpack.c.b16 %v816, %v815
    %v840 = vpack.c.b16 %v818, %v817
    %v841 = vpack.c.b16 %v820, %v819
    %v842 = vpack.c.b16 %v822, %v821
    %v843 = vpack.c.b16 %v824, %v823
    %v844 = vpack.c.b16 %v826, %v825
    %v845 = vpack.c.b16 %v828, %v827
    %v846 = vpack.c.b16 %v830, %v829
    %863 = vmatprep.subr.bf16.mxu0 0
    %864 = vmatpush1.bf16.msra.mxu0 %v831
    %865 = vmatprep.subr.bf16.mxu0 0
    %866 = vmatpush1.bf16.msra.mxu0 %v832
    %867 = vmatprep.subr.bf16.mxu0 0
    %868 = vmatpush1.bf16.msra.mxu0 %v833
    %869 = vmatprep.subr.bf16.mxu0 0
    %870 = vmatpush1.bf16.msra.mxu0 %v834
    %871 = vmatprep.subr.bf16.mxu0 0
    %872 = vmatpush1.bf16.msra.mxu0 %v835
    %873 = vmatprep.subr.bf16.mxu0 0
    %874 = vmatpush1.bf16.msra.mxu0 %v836
    %875 = vmatprep.subr.bf16.mxu0 0
    %876 = vmatpush1.bf16.msra.mxu0 %v837
    %877 = vmatprep.subr.bf16.mxu0 0
    %878 = vmatpush1.bf16.msra.mxu0 %v838
    %879 = vmatprep.subr.bf16.mxu0 0
    %880 = vmatpush1.bf16.msra.mxu0 %v839
    %881 = vmatprep.subr.bf16.mxu0 0
    %882 = vmatpush1.bf16.msra.mxu0 %v840
    %883 = vmatprep.subr.bf16.mxu0 0
    %884 = vmatpush1.bf16.msra.mxu0 %v841
    %885 = vmatprep.subr.bf16.mxu0 0
    %886 = vmatpush1.bf16.msra.mxu0 %v842
    %887 = vmatprep.subr.bf16.mxu0 0
    %888 = vmatpush1.bf16.msra.mxu0 %v843
    %889 = vmatprep.subr.bf16.mxu0 0
    %890 = vmatpush1.bf16.msra.mxu0 %v844
    %891 = vmatprep.subr.bf16.mxu0 0
    %892 = vmatpush1.bf16.msra.mxu0 %v845
    %893 = vmatprep.subr.bf16.mxu0 0
    %894 = vmatpush1.bf16.msra.mxu0 %v846
    %895 = vmatprep.mubr.bf16.mxu0 %v764
    %896 = vmatmul.mubr.bf16.gmra.mrb[0].mxu0 %v763
    %v897 = vpop.f32.mrb[0].mxu0
    %v898 = vadd.f32 %v758, %v897
    %v899 = vpop.f32.mrb[0].mxu0
    %v900 = vpop.f32.mrb[0].mxu0
    %v901 = vpop.f32.mrb[0].mxu0
    %902 = vdwg.mxu0
    %v903 = vmax.f32 %v898, 0.0
    %v904 = vpack.c.bf16 %v903, %v903
    %v905 = vld [vmem:[#allocation10] sm:$0xff]
    %v906 = vld [vmem:[#allocation10 + $0x8] sm:$0xff]
    %v907 = vld [vmem:[#allocation10 + $0x10] sm:$0xff]
    %v908 = vld [vmem:[#allocation10 + $0x18] sm:$0xff]
    %v909 = vld [vmem:[#allocation10 + $0x20] sm:$0xff]
    %v910 = vld [vmem:[#allocation10 + $0x28] sm:$0xff]
    %v911 = vld [vmem:[#allocation10 + $0x30] sm:$0xff]
    %v912 = vld [vmem:[#allocation10 + $0x38] sm:$0xff]
    %v913 = vld [vmem:[#allocation10 + $0x40] sm:$0xff]
    %v914 = vld [vmem:[#allocation10 + $0x48] sm:$0xff]
    %v915 = vld [vmem:[#allocation10 + $0x50] sm:$0xff]
    %v916 = vld [vmem:[#allocation10 + $0x58] sm:$0xff]
    %v917 = vld [vmem:[#allocation10 + $0x60] sm:$0xff]
    %v918 = vld [vmem:[#allocation10 + $0x68] sm:$0xff]
    %v919 = vld [vmem:[#allocation10 + $0x70] sm:$0xff]
    %v920 = vld [vmem:[#allocation10 + $0x78] sm:$0xff]
    %v921 = vld [vmem:[%s6] sm:$0x3]
    %v923 = vlaneseq
    %v924 = vshrl.u32 %v923, 7
    %v925 = vsub.s32 0, %v924
    %v926 = vrot.slane %v921, %v925
    %v927 = vlaneseq
    %v928 = vshrl.u32 %v927, 7
    %v929 = vsub.s32 1, %v928
    %v930 = vrot.slane %v921, %v929
    %v949 = vunpack.c.l.b16 %v905
    %v950 = vunpack.c.h.b16 %v905
    %v951 = vunpack.c.l.b16 %v906
    %v952 = vunpack.c.h.b16 %v906
    %v953 = vunpack.c.l.b16 %v907
    %v954 = vunpack.c.h.b16 %v907
    %v955 = vunpack.c.l.b16 %v908
    %v956 = vunpack.c.h.b16 %v908
    %v957 = vunpack.c.l.b16 %v909
    %v958 = vunpack.c.h.b16 %v909
    %v959 = vunpack.c.l.b16 %v910
    %v960 = vunpack.c.h.b16 %v910
    %v961 = vunpack.c.l.b16 %v911
    %v962 = vunpack.c.h.b16 %v911
    %v963 = vunpack.c.l.b16 %v912
    %v964 = vunpack.c.h.b16 %v912
    %v965 = vunpack.c.l.b16 %v913
    %v966 = vunpack.c.h.b16 %v913
    %v967 = vunpack.c.l.b16 %v914
    %v968 = vunpack.c.h.b16 %v914
    %v969 = vunpack.c.l.b16 %v915
    %v970 = vunpack.c.h.b16 %v915
    %v971 = vunpack.c.l.b16 %v916
    %v972 = vunpack.c.h.b16 %v916
    %v973 = vunpack.c.l.b16 %v917
    %v974 = vunpack.c.h.b16 %v917
    %v975 = vunpack.c.l.b16 %v918
    %v976 = vunpack.c.h.b16 %v918
    %v977 = vunpack.c.l.b16 %v919
    %v978 = vunpack.c.h.b16 %v919
    %v979 = vunpack.c.l.b16 %v920
    %v980 = vunpack.c.h.b16 %v920
    %v981 = vpack.c.b16 %v951, %v949
    %v982 = vpack.c.b16 %v952, %v950
    %v983 = vpack.c.b16 %v955, %v953
    %v984 = vpack.c.b16 %v956, %v954
    %v985 = vpack.c.b16 %v959, %v957
    %v986 = vpack.c.b16 %v960, %v958
    %v987 = vpack.c.b16 %v963, %v961
    %v988 = vpack.c.b16 %v964, %v962
    %v989 = vpack.c.b16 %v967, %v965
    %v990 = vpack.c.b16 %v968, %v966
    %v991 = vpack.c.b16 %v971, %v969
    %v992 = vpack.c.b16 %v972, %v970
    %v993 = vpack.c.b16 %v975, %v973
    %v994 = vpack.c.b16 %v976, %v974
    %v995 = vpack.c.b16 %v979, %v977
    %v996 = vpack.c.b16 %v980, %v978
    %1013 = vmatprep.subr.bf16.mxu0 %v982
    %1014 = vmatpush1.bf16.msra.mxu0 %v981
    %1015 = vmatprep.subr.bf16.mxu0 %v984
    %1016 = vmatpush1.bf16.msra.mxu0 %v983
    %1017 = vmatprep.subr.bf16.mxu0 %v986
    %1018 = vmatpush1.bf16.msra.mxu0 %v985
    %1019 = vmatprep.subr.bf16.mxu0 %v988
    %1020 = vmatpush1.bf16.msra.mxu0 %v987
    %1021 = vmatprep.subr.bf16.mxu0 %v990
    %1022 = vmatpush1.bf16.msra.mxu0 %v989
    %1023 = vmatprep.subr.bf16.mxu0 %v992
    %1024 = vmatpush1.bf16.msra.mxu0 %v991
    %1025 = vmatprep.subr.bf16.mxu0 %v994
    %1026 = vmatpush1.bf16.msra.mxu0 %v993
    %1027 = vmatprep.subr.bf16.mxu0 %v996
    %1028 = vmatpush1.bf16.msra.mxu0 %v995
    %1029 = vmatprep.subr.bf16.mxu0 0
    %1030 = vmatpush1.bf16.msra.mxu0 0
    %1031 = vmatprep.subr.bf16.mxu0 0
    %1032 = vmatpush1.bf16.msra.mxu0 0
    %1033 = vmatprep.subr.bf16.mxu0 0
    %1034 = vmatpush1.bf16.msra.mxu0 0
    %1035 = vmatprep.subr.bf16.mxu0 0
    %1036 = vmatpush1.bf16.msra.mxu0 0
    %1037 = vmatprep.subr.bf16.mxu0 0
    %1038 = vmatpush1.bf16.msra.mxu0 0
    %1039 = vmatprep.subr.bf16.mxu0 0
    %1040 = vmatpush1.bf16.msra.mxu0 0
    %1041 = vmatprep.subr.bf16.mxu0 0
    %1042 = vmatpush1.bf16.msra.mxu0 0
    %1043 = vmatprep.subr.bf16.mxu0 0
    %1044 = vmatpush1.bf16.msra.mxu0 0
    %1045 = vmatprep.mubr.bf16.mxu0 0
    %1046 = vmatmul.mubr.bf16.gmra.mrb[0].mxu0 %v904
    %v1047 = vpop.f32.mrb[0].mxu0
    %v1048 = vadd.f32 %v926, %v1047
    %v1049 = vpop.f32.mrb[0].mxu0
    %v1050 = vadd.f32 %v930, %v1049
    %v1051 = vpop.f32.mrb[0].mxu0
    %v1052 = vpop.f32.mrb[0].mxu0
    %1053 = vdwg.mxu0
    %v1054 = vmax.f32 %v1048, 0.0
    %v1055 = vmax.f32 %v1050, 0.0
    %v1056 = vpack.c.bf16 %v1054, %v1054
    %v1057 = vpack.c.bf16 %v1055, %v1055
    %v1058 = vld [vmem:[#allocation11] sm:$0xff]
    %v1059 = vld [vmem:[#allocation11 + $0x8] sm:$0xff]
    %v1060 = vld [vmem:[#allocation11 + $0x10] sm:$0xff]
    %v1061 = vld [vmem:[#allocation11 + $0x18] sm:$0xff]
    %v1062 = vld [vmem:[#allocation11 + $0x20] sm:$0xff]
    %v1063 = vld [vmem:[#allocation11 + $0x28] sm:$0xff]
    %v1064 = vld [vmem:[#allocation11 + $0x30] sm:$0xff]
    %v1065 = vld [vmem:[#allocation11 + $0x38] sm:$0xff]
    %v1066 = vld [vmem:[#allocation11 + $0x40] sm:$0xff]
    %v1067 = vld [vmem:[#allocation11 + $0x48] sm:$0xff]
    %v1068 = vld [vmem:[#allocation11 + $0x50] sm:$0xff]
    %v1069 = vld [vmem:[#allocation11 + $0x58] sm:$0xff]
    %v1070 = vld [vmem:[#allocation11 + $0x60] sm:$0xff]
    %v1071 = vld [vmem:[#allocation11 + $0x68] sm:$0xff]
    %v1072 = vld [vmem:[#allocation11 + $0x70] sm:$0xff]
    %v1073 = vld [vmem:[#allocation11 + $0x78] sm:$0xff]
    %v1074 = vld [vmem:[#allocation11 + $0x80] sm:$0xff]
    %v1075 = vld [vmem:[#allocation11 + $0x88] sm:$0xff]
    %v1076 = vld [vmem:[#allocation11 + $0x90] sm:$0xff]
    %v1077 = vld [vmem:[#allocation11 + $0x98] sm:$0xff]
    %v1078 = vld [vmem:[#allocation11 + $0xa0] sm:$0xff]
    %v1079 = vld [vmem:[#allocation11 + $0xa8] sm:$0xff]
    %v1080 = vld [vmem:[#allocation11 + $0xb0] sm:$0xff]
    %v1081 = vld [vmem:[#allocation11 + $0xb8] sm:$0xff]
    %v1082 = vld [vmem:[#allocation11 + $0xc0] sm:$0xff]
    %v1083 = vld [vmem:[#allocation11 + $0xc8] sm:$0xff]
    %v1084 = vld [vmem:[#allocation11 + $0xd0] sm:$0xff]
    %v1085 = vld [vmem:[#allocation11 + $0xd8] sm:$0xff]
    %v1086 = vld [vmem:[#allocation11 + $0xe0] sm:$0xff]
    %v1087 = vld [vmem:[#allocation11 + $0xe8] sm:$0xff]
    %v1088 = vld [vmem:[#allocation11 + $0xf0] sm:$0xff]
    %v1089 = vld [vmem:[#allocation11 + $0xf8] sm:$0xff]
    %v1090 = vld [vmem:[%s8] sm:$0x3]
    %v1092 = vlaneseq
    %v1093 = vshrl.u32 %v1092, 7
    %v1094 = vsub.s32 0, %v1093
    %v1095 = vrot.slane %v1090, %v1094
    %v1096 = vlaneseq
    %v1097 = vshrl.u32 %v1096, 7
    %v1098 = vsub.s32 1, %v1097
    %v1099 = vrot.slane %v1090, %v1098
    %v1134 = vunpack.c.l.b16 %v1058
    %v1135 = vunpack.c.h.b16 %v1058
    %v1136 = vunpack.c.l.b16 %v1059
    %v1137 = vunpack.c.h.b16 %v1059
    %v1138 = vunpack.c.l.b16 %v1060
    %v1139 = vunpack.c.h.b16 %v1060
    %v1140 = vunpack.c.l.b16 %v1061
    %v1141 = vunpack.c.h.b16 %v1061
    %v1142 = vunpack.c.l.b16 %v1062
    %v1143 = vunpack.c.h.b16 %v1062
    %v1144 = vunpack.c.l.b16 %v1063
    %v1145 = vunpack.c.h.b16 %v1063
    %v1146 = vunpack.c.l.b16 %v1064
    %v1147 = vunpack.c.h.b16 %v1064
    %v1148 = vunpack.c.l.b16 %v1065
    %v1149 = vunpack.c.h.b16 %v1065
    %v1150 = vunpack.c.l.b16 %v1066
    %v1151 = vunpack.c.h.b16 %v1066
    %v1152 = vunpack.c.l.b16 %v1067
    %v1153 = vunpack.c.h.b16 %v1067
    %v1154 = vunpack.c.l.b16 %v1068
    %v1155 = vunpack.c.h.b16 %v1068
    %v1156 = vunpack.c.l.b16 %v1069
    %v1157 = vunpack.c.h.b16 %v1069
    %v1158 = vunpack.c.l.b16 %v1070
    %v1159 = vunpack.c.h.b16 %v1070
    %v1160 = vunpack.c.l.b16 %v1071
    %v1161 = vunpack.c.h.b16 %v1071
    %v1162 = vunpack.c.l.b16 %v1072
    %v1163 = vunpack.c.h.b16 %v1072
    %v1164 = vunpack.c.l.b16 %v1073
    %v1165 = vunpack.c.h.b16 %v1073
    %v1166 = vunpack.c.l.b16 %v1074
    %v1167 = vunpack.c.h.b16 %v1074
    %v1168 = vunpack.c.l.b16 %v1075
    %v1169 = vunpack.c.h.b16 %v1075
    %v1170 = vunpack.c.l.b16 %v1076
    %v1171 = vunpack.c.h.b16 %v1076
    %v1172 = vunpack.c.l.b16 %v1077
    %v1173 = vunpack.c.h.b16 %v1077
    %v1174 = vunpack.c.l.b16 %v1078
    %v1175 = vunpack.c.h.b16 %v1078
    %v1176 = vunpack.c.l.b16 %v1079
    %v1177 = vunpack.c.h.b16 %v1079
    %v1178 = vunpack.c.l.b16 %v1080
    %v1179 = vunpack.c.h.b16 %v1080
    %v1180 = vunpack.c.l.b16 %v1081
    %v1181 = vunpack.c.h.b16 %v1081
    %v1182 = vunpack.c.l.b16 %v1082
    %v1183 = vunpack.c.h.b16 %v1082
    %v1184 = vunpack.c.l.b16 %v1083
    %v1185 = vunpack.c.h.b16 %v1083
    %v1186 = vunpack.c.l.b16 %v1084
    %v1187 = vunpack.c.h.b16 %v1084
    %v1188 = vunpack.c.l.b16 %v1085
    %v1189 = vunpack.c.h.b16 %v1085
    %v1190 = vunpack.c.l.b16 %v1086
    %v1191 = vunpack.c.h.b16 %v1086
    %v1192 = vunpack.c.l.b16 %v1087
    %v1193 = vunpack.c.h.b16 %v1087
    %v1194 = vunpack.c.l.b16 %v1088
    %v1195 = vunpack.c.h.b16 %v1088
    %v1196 = vunpack.c.l.b16 %v1089
    %v1197 = vunpack.c.h.b16 %v1089
    %v1198 = vpack.c.b16 %v1136, %v1134
    %v1199 = vpack.c.b16 %v1137, %v1135
    %v1200 = vpack.c.b16 %v1140, %v1138
    %v1201 = vpack.c.b16 %v1141, %v1139
    %v1202 = vpack.c.b16 %v1144, %v1142
    %v1203 = vpack.c.b16 %v1145, %v1143
    %v1204 = vpack.c.b16 %v1148, %v1146
    %v1205 = vpack.c.b16 %v1149, %v1147
    %v1206 = vpack.c.b16 %v1152, %v1150
    %v1207 = vpack.c.b16 %v1153, %v1151
    %v1208 = vpack.c.b16 %v1156, %v1154
    %v1209 = vpack.c.b16 %v1157, %v1155
    %v1210 = vpack.c.b16 %v1160, %v1158
    %v1211 = vpack.c.b16 %v1161, %v1159
    %v1212 = vpack.c.b16 %v1164, %v1162
    %v1213 = vpack.c.b16 %v1165, %v1163
    %v1214 = vpack.c.b16 %v1168, %v1166
    %v1215 = vpack.c.b16 %v1169, %v1167
    %v1216 = vpack.c.b16 %v1172, %v1170
    %v1217 = vpack.c.b16 %v1173, %v1171
    %v1218 = vpack.c.b16 %v1176, %v1174
    %v1219 = vpack.c.b16 %v1177, %v1175
    %v1220 = vpack.c.b16 %v1180, %v1178
    %v1221 = vpack.c.b16 %v1181, %v1179
    %v1222 = vpack.c.b16 %v1184, %v1182
    %v1223 = vpack.c.b16 %v1185, %v1183
    %v1224 = vpack.c.b16 %v1188, %v1186
    %v1225 = vpack.c.b16 %v1189, %v1187
    %v1226 = vpack.c.b16 %v1192, %v1190
    %v1227 = vpack.c.b16 %v1193, %v1191
    %v1228 = vpack.c.b16 %v1196, %v1194
    %v1229 = vpack.c.b16 %v1197, %v1195
    %1262 = vmatprep.subr.bf16.mxu0 %v1199
    %1263 = vmatpush1.bf16.msra.mxu0 %v1198
    %1264 = vmatprep.subr.bf16.mxu0 %v1201
    %1265 = vmatpush1.bf16.msra.mxu0 %v1200
    %1266 = vmatprep.subr.bf16.mxu0 %v1203
    %1267 = vmatpush1.bf16.msra.mxu0 %v1202
    %1268 = vmatprep.subr.bf16.mxu0 %v1205
    %1269 = vmatpush1.bf16.msra.mxu0 %v1204
    %1270 = vmatprep.subr.bf16.mxu0 %v1207
    %1271 = vmatpush1.bf16.msra.mxu0 %v1206
    %1272 = vmatprep.subr.bf16.mxu0 %v1209
    %1273 = vmatpush1.bf16.msra.mxu0 %v1208
    %1274 = vmatprep.subr.bf16.mxu0 %v1211
    %1275 = vmatpush1.bf16.msra.mxu0 %v1210
    %1276 = vmatprep.subr.bf16.mxu0 %v1213
    %1277 = vmatpush1.bf16.msra.mxu0 %v1212
    %1278 = vmatprep.subr.bf16.mxu0 %v1215
    %1279 = vmatpush1.bf16.msra.mxu0 %v1214
    %1280 = vmatprep.subr.bf16.mxu0 %v1217
    %1281 = vmatpush1.bf16.msra.mxu0 %v1216
    %1282 = vmatprep.subr.bf16.mxu0 %v1219
    %1283 = vmatpush1.bf16.msra.mxu0 %v1218
    %1284 = vmatprep.subr.bf16.mxu0 %v1221
    %1285 = vmatpush1.bf16.msra.mxu0 %v1220
    %1286 = vmatprep.subr.bf16.mxu0 %v1223
    %1287 = vmatpush1.bf16.msra.mxu0 %v1222
    %1288 = vmatprep.subr.bf16.mxu0 %v1225
    %1289 = vmatpush1.bf16.msra.mxu0 %v1224
    %1290 = vmatprep.subr.bf16.mxu0 %v1227
    %1291 = vmatpush1.bf16.msra.mxu0 %v1226
    %1292 = vmatprep.subr.bf16.mxu0 %v1229
    %1293 = vmatpush1.bf16.msra.mxu0 %v1228
    %1294 = vmatprep.mubr.bf16.mxu0 %v1057
    %1295 = vmatmul.mubr.bf16.gmra.mrb[0].mxu0 %v1056
    %v1296 = vpop.f32.mrb[0].mxu0
    %v1297 = vadd.f32 %v1095, %v1296
    %v1298 = vpop.f32.mrb[0].mxu0
    %v1299 = vadd.f32 %v1099, %v1298
    %v1300 = vpop.f32.mrb[0].mxu0
    %v1301 = vpop.f32.mrb[0].mxu0
    %1302 = vdwg.mxu0
    %v1303 = vmul.f32 %v1297, %v1297
    %1304 = vadd.xlane.f32.xlu0 %v1303
    %v1305 = vpop.xlane.xlu0 %1304
    %v1306 = vmax.f32 %v1305, 1e-24
    %v1307 = vrsqrt.pop %v1306
    %v1308 = vmul.f32 %v1297, %v1307
    %s1309 = scalar_lea.vmem [#allocation13], 8
    %1310 = vst [vmem:[%s1309] sm:$0xff] %v1308
    %v1311 = vsel %vm707, %v1299, -inf
    %1312 = vmax.xlane.f32.xlu0 %v1311
    %v1313 = vpop.xlane.xlu0 %1312
    %v1314 = vsub.f32 %v1299, %v1313
    %v1315 = vmul.f32 %v1314, 1.442695
    %v1316 = vpow.pop %v1315
    %v1317 = vsel %vm707, %v1316, 0.0
    %1318 = vadd.xlane.f32.xlu0 %v1317
    %v1319 = vpop.xlane.xlu0 %1318
    %v1320 = vrcp.pop %v1319
    %v1321 = vmul.f32 %v1317, %v1320
    %s1322 = scalar_lea.vmem [#allocation14], 8
    %1323 = vst [vmem:[%s1322] sm:$0xff] %v1321
    %v1324 = vld [vmem:[#allocation7] sm:$0xff]
    %v1325 = vld [vmem:[#allocation8] sm:$0xf]
    %v1326 = vld [vmem:[#allocation8 + $0x4] sm:$0xf]
    %v1327 = vld [vmem:[#allocation8 + $0x8] sm:$0xf]
    %v1328 = vld [vmem:[#allocation8 + $0xc] sm:$0xf]
    %v1329 = vld [vmem:[#allocation8 + $0x10] sm:$0xf]
    %v1330 = vld [vmem:[#allocation8 + $0x14] sm:$0xf]
    %v1331 = vld [vmem:[#allocation8 + $0x18] sm:$0xf]
    %v1332 = vld [vmem:[#allocation8 + $0x1c] sm:$0xf]
    %v1333 = vld [vmem:[#allocation8 + $0x20] sm:$0xf]
    %v1334 = vld [vmem:[#allocation8 + $0x24] sm:$0xf]
    %v1335 = vld [vmem:[#allocation8 + $0x28] sm:$0xf]
    %v1336 = vld [vmem:[#allocation8 + $0x2c] sm:$0xf]
    %v1337 = vld [vmem:[#allocation8 + $0x30] sm:$0xf]
    %v1338 = vld [vmem:[#allocation8 + $0x34] sm:$0xf]
    %v1339 = vld [vmem:[#allocation8 + $0x38] sm:$0xf]
    %v1340 = vld [vmem:[#allocation8 + $0x3c] sm:$0xf]
    %v1341 = vld [vmem:[#allocation8 + $0x40] sm:$0xf]
    %v1342 = vld [vmem:[#allocation8 + $0x44] sm:$0xf]
    %v1343 = vld [vmem:[#allocation8 + $0x48] sm:$0xf]
    %v1344 = vld [vmem:[#allocation8 + $0x4c] sm:$0xf]
    %v1345 = vld [vmem:[#allocation8 + $0x50] sm:$0xf]
    %v1346 = vld [vmem:[#allocation8 + $0x54] sm:$0xf]
    %v1347 = vld [vmem:[#allocation8 + $0x58] sm:$0xf]
    %v1348 = vld [vmem:[#allocation8 + $0x5c] sm:$0xf]
    %v1349 = vld [vmem:[#allocation8 + $0x60] sm:$0xf]
    %v1350 = vld [vmem:[#allocation8 + $0x64] sm:$0xf]
    %v1351 = vld [vmem:[#allocation8 + $0x68] sm:$0xf]
    %v1352 = vld [vmem:[#allocation8 + $0x6c] sm:$0xf]
    %v1353 = vld [vmem:[#allocation8 + $0x70] sm:$0xf]
    %v1354 = vld [vmem:[#allocation8 + $0x74] sm:$0xf]
    %v1355 = vld [vmem:[#allocation8 + $0x78] sm:$0xf]
    %v1356 = vld [vmem:[#allocation8 + $0x7c] sm:$0xf]
    %v1357 = vld [vmem:[%s4] sm:$0x1]
    %v1359 = vlaneseq
    %v1360 = vshrl.u32 %v1359, 7
    %v1361 = vsub.s32 0, %v1360
    %v1362 = vrot.slane %v1357, %v1361
    %v1365 = vunpack.c.l.b16 %v1324
    %v1366 = vunpack.c.h.b16 %v1324
    %v1367 = vpack.c.b16 %v1365, %v1365
    %v1368 = vpack.c.b16 %v1366, %v1366
    %v1403 = vunpack.c.l.b16 %v1325
    %v1404 = vunpack.c.l.b16 %v1326
    %v1405 = vunpack.c.l.b16 %v1327
    %v1406 = vunpack.c.l.b16 %v1328
    %v1407 = vunpack.c.l.b16 %v1329
    %v1408 = vunpack.c.l.b16 %v1330
    %v1409 = vunpack.c.l.b16 %v1331
    %v1410 = vunpack.c.l.b16 %v1332
    %v1411 = vunpack.c.l.b16 %v1333
    %v1412 = vunpack.c.l.b16 %v1334
    %v1413 = vunpack.c.l.b16 %v1335
    %v1414 = vunpack.c.l.b16 %v1336
    %v1415 = vunpack.c.l.b16 %v1337
    %v1416 = vunpack.c.l.b16 %v1338
    %v1417 = vunpack.c.l.b16 %v1339
    %v1418 = vunpack.c.l.b16 %v1340
    %v1419 = vunpack.c.l.b16 %v1341
    %v1420 = vunpack.c.l.b16 %v1342
    %v1421 = vunpack.c.l.b16 %v1343
    %v1422 = vunpack.c.l.b16 %v1344
    %v1423 = vunpack.c.l.b16 %v1345
    %v1424 = vunpack.c.l.b16 %v1346
    %v1425 = vunpack.c.l.b16 %v1347
    %v1426 = vunpack.c.l.b16 %v1348
    %v1427 = vunpack.c.l.b16 %v1349
    %v1428 = vunpack.c.l.b16 %v1350
    %v1429 = vunpack.c.l.b16 %v1351
    %v1430 = vunpack.c.l.b16 %v1352
    %v1431 = vunpack.c.l.b16 %v1353
    %v1432 = vunpack.c.l.b16 %v1354
    %v1433 = vunpack.c.l.b16 %v1355
    %v1434 = vunpack.c.l.b16 %v1356
    %v1435 = vpack.c.b16 %v1404, %v1403
    %v1436 = vpack.c.b16 %v1406, %v1405
    %v1437 = vpack.c.b16 %v1408, %v1407
    %v1438 = vpack.c.b16 %v1410, %v1409
    %v1439 = vpack.c.b16 %v1412, %v1411
    %v1440 = vpack.c.b16 %v1414, %v1413
    %v1441 = vpack.c.b16 %v1416, %v1415
    %v1442 = vpack.c.b16 %v1418, %v1417
    %v1443 = vpack.c.b16 %v1420, %v1419
    %v1444 = vpack.c.b16 %v1422, %v1421
    %v1445 = vpack.c.b16 %v1424, %v1423
    %v1446 = vpack.c.b16 %v1426, %v1425
    %v1447 = vpack.c.b16 %v1428, %v1427
    %v1448 = vpack.c.b16 %v1430, %v1429
    %v1449 = vpack.c.b16 %v1432, %v1431
    %v1450 = vpack.c.b16 %v1434, %v1433
    %1467 = vmatprep.subr.bf16.mxu0 0
    %1468 = vmatpush1.bf16.msra.mxu0 %v1435
    %1469 = vmatprep.subr.bf16.mxu0 0
    %1470 = vmatpush1.bf16.msra.mxu0 %v1436
    %1471 = vmatprep.subr.bf16.mxu0 0
    %1472 = vmatpush1.bf16.msra.mxu0 %v1437
    %1473 = vmatprep.subr.bf16.mxu0 0
    %1474 = vmatpush1.bf16.msra.mxu0 %v1438
    %1475 = vmatprep.subr.bf16.mxu0 0
    %1476 = vmatpush1.bf16.msra.mxu0 %v1439
    %1477 = vmatprep.subr.bf16.mxu0 0
    %1478 = vmatpush1.bf16.msra.mxu0 %v1440
    %1479 = vmatprep.subr.bf16.mxu0 0
    %1480 = vmatpush1.bf16.msra.mxu0 %v1441
    %1481 = vmatprep.subr.bf16.mxu0 0
    %1482 = vmatpush1.bf16.msra.mxu0 %v1442
    %1483 = vmatprep.subr.bf16.mxu0 0
    %1484 = vmatpush1.bf16.msra.mxu0 %v1443
    %1485 = vmatprep.subr.bf16.mxu0 0
    %1486 = vmatpush1.bf16.msra.mxu0 %v1444
    %1487 = vmatprep.subr.bf16.mxu0 0
    %1488 = vmatpush1.bf16.msra.mxu0 %v1445
    %1489 = vmatprep.subr.bf16.mxu0 0
    %1490 = vmatpush1.bf16.msra.mxu0 %v1446
    %1491 = vmatprep.subr.bf16.mxu0 0
    %1492 = vmatpush1.bf16.msra.mxu0 %v1447
    %1493 = vmatprep.subr.bf16.mxu0 0
    %1494 = vmatpush1.bf16.msra.mxu0 %v1448
    %1495 = vmatprep.subr.bf16.mxu0 0
    %1496 = vmatpush1.bf16.msra.mxu0 %v1449
    %1497 = vmatprep.subr.bf16.mxu0 0
    %1498 = vmatpush1.bf16.msra.mxu0 %v1450
    %1499 = vmatprep.mubr.bf16.mxu0 %v1368
    %1500 = vmatmul.mubr.bf16.gmra.mrb[0].mxu0 %v1367
    %v1501 = vpop.f32.mrb[0].mxu0
    %v1502 = vadd.f32 %v1362, %v1501
    %v1503 = vpop.f32.mrb[0].mxu0
    %v1504 = vpop.f32.mrb[0].mxu0
    %v1505 = vpop.f32.mrb[0].mxu0
    %1506 = vdwg.mxu0
    %v1507 = vmax.f32 %v1502, 0.0
    %v1508 = vpack.c.bf16 %v1507, %v1507
    %v1509 = vld [vmem:[#allocation10] sm:$0xff]
    %v1510 = vld [vmem:[#allocation10 + $0x8] sm:$0xff]
    %v1511 = vld [vmem:[#allocation10 + $0x10] sm:$0xff]
    %v1512 = vld [vmem:[#allocation10 + $0x18] sm:$0xff]
    %v1513 = vld [vmem:[#allocation10 + $0x20] sm:$0xff]
    %v1514 = vld [vmem:[#allocation10 + $0x28] sm:$0xff]
    %v1515 = vld [vmem:[#allocation10 + $0x30] sm:$0xff]
    %v1516 = vld [vmem:[#allocation10 + $0x38] sm:$0xff]
    %v1517 = vld [vmem:[#allocation10 + $0x40] sm:$0xff]
    %v1518 = vld [vmem:[#allocation10 + $0x48] sm:$0xff]
    %v1519 = vld [vmem:[#allocation10 + $0x50] sm:$0xff]
    %v1520 = vld [vmem:[#allocation10 + $0x58] sm:$0xff]
    %v1521 = vld [vmem:[#allocation10 + $0x60] sm:$0xff]
    %v1522 = vld [vmem:[#allocation10 + $0x68] sm:$0xff]
    %v1523 = vld [vmem:[#allocation10 + $0x70] sm:$0xff]
    %v1524 = vld [vmem:[#allocation10 + $0x78] sm:$0xff]
    %v1525 = vld [vmem:[%s6] sm:$0x3]
    %v1527 = vlaneseq
    %v1528 = vshrl.u32 %v1527, 7
    %v1529 = vsub.s32 0, %v1528
    %v1530 = vrot.slane %v1525, %v1529
    %v1531 = vlaneseq
    %v1532 = vshrl.u32 %v1531, 7
    %v1533 = vsub.s32 1, %v1532
    %v1534 = vrot.slane %v1525, %v1533
    %v1553 = vunpack.c.l.b16 %v1509
    %v1554 = vunpack.c.h.b16 %v1509
    %v1555 = vunpack.c.l.b16 %v1510
    %v1556 = vunpack.c.h.b16 %v1510
    %v1557 = vunpack.c.l.b16 %v1511
    %v1558 = vunpack.c.h.b16 %v1511
    %v1559 = vunpack.c.l.b16 %v1512
    %v1560 = vunpack.c.h.b16 %v1512
    %v1561 = vunpack.c.l.b16 %v1513
    %v1562 = vunpack.c.h.b16 %v1513
    %v1563 = vunpack.c.l.b16 %v1514
    %v1564 = vunpack.c.h.b16 %v1514
    %v1565 = vunpack.c.l.b16 %v1515
    %v1566 = vunpack.c.h.b16 %v1515
    %v1567 = vunpack.c.l.b16 %v1516
    %v1568 = vunpack.c.h.b16 %v1516
    %v1569 = vunpack.c.l.b16 %v1517
    %v1570 = vunpack.c.h.b16 %v1517
    %v1571 = vunpack.c.l.b16 %v1518
    %v1572 = vunpack.c.h.b16 %v1518
    %v1573 = vunpack.c.l.b16 %v1519
    %v1574 = vunpack.c.h.b16 %v1519
    %v1575 = vunpack.c.l.b16 %v1520
    %v1576 = vunpack.c.h.b16 %v1520
    %v1577 = vunpack.c.l.b16 %v1521
    %v1578 = vunpack.c.h.b16 %v1521
    %v1579 = vunpack.c.l.b16 %v1522
    %v1580 = vunpack.c.h.b16 %v1522
    %v1581 = vunpack.c.l.b16 %v1523
    %v1582 = vunpack.c.h.b16 %v1523
    %v1583 = vunpack.c.l.b16 %v1524
    %v1584 = vunpack.c.h.b16 %v1524
    %v1585 = vpack.c.b16 %v1555, %v1553
    %v1586 = vpack.c.b16 %v1556, %v1554
    %v1587 = vpack.c.b16 %v1559, %v1557
    %v1588 = vpack.c.b16 %v1560, %v1558
    %v1589 = vpack.c.b16 %v1563, %v1561
    %v1590 = vpack.c.b16 %v1564, %v1562
    %v1591 = vpack.c.b16 %v1567, %v1565
    %v1592 = vpack.c.b16 %v1568, %v1566
    %v1593 = vpack.c.b16 %v1571, %v1569
    %v1594 = vpack.c.b16 %v1572, %v1570
    %v1595 = vpack.c.b16 %v1575, %v1573
    %v1596 = vpack.c.b16 %v1576, %v1574
    %v1597 = vpack.c.b16 %v1579, %v1577
    %v1598 = vpack.c.b16 %v1580, %v1578
    %v1599 = vpack.c.b16 %v1583, %v1581
    %v1600 = vpack.c.b16 %v1584, %v1582
    %1617 = vmatprep.subr.bf16.mxu0 %v1586
    %1618 = vmatpush1.bf16.msra.mxu0 %v1585
    %1619 = vmatprep.subr.bf16.mxu0 %v1588
    %1620 = vmatpush1.bf16.msra.mxu0 %v1587
    %1621 = vmatprep.subr.bf16.mxu0 %v1590
    %1622 = vmatpush1.bf16.msra.mxu0 %v1589
    %1623 = vmatprep.subr.bf16.mxu0 %v1592
    %1624 = vmatpush1.bf16.msra.mxu0 %v1591
    %1625 = vmatprep.subr.bf16.mxu0 %v1594
    %1626 = vmatpush1.bf16.msra.mxu0 %v1593
    %1627 = vmatprep.subr.bf16.mxu0 %v1596
    %1628 = vmatpush1.bf16.msra.mxu0 %v1595
    %1629 = vmatprep.subr.bf16.mxu0 %v1598
    %1630 = vmatpush1.bf16.msra.mxu0 %v1597
    %1631 = vmatprep.subr.bf16.mxu0 %v1600
    %1632 = vmatpush1.bf16.msra.mxu0 %v1599
    %1633 = vmatprep.subr.bf16.mxu0 0
    %1634 = vmatpush1.bf16.msra.mxu0 0
    %1635 = vmatprep.subr.bf16.mxu0 0
    %1636 = vmatpush1.bf16.msra.mxu0 0
    %1637 = vmatprep.subr.bf16.mxu0 0
    %1638 = vmatpush1.bf16.msra.mxu0 0
    %1639 = vmatprep.subr.bf16.mxu0 0
    %1640 = vmatpush1.bf16.msra.mxu0 0
    %1641 = vmatprep.subr.bf16.mxu0 0
    %1642 = vmatpush1.bf16.msra.mxu0 0
    %1643 = vmatprep.subr.bf16.mxu0 0
    %1644 = vmatpush1.bf16.msra.mxu0 0
    %1645 = vmatprep.subr.bf16.mxu0 0
    %1646 = vmatpush1.bf16.msra.mxu0 0
    %1647 = vmatprep.subr.bf16.mxu0 0
    %1648 = vmatpush1.bf16.msra.mxu0 0
    %1649 = vmatprep.mubr.bf16.mxu0 0
    %1650 = vmatmul.mubr.bf16.gmra.mrb[0].mxu0 %v1508
    %v1651 = vpop.f32.mrb[0].mxu0
    %v1652 = vadd.f32 %v1530, %v1651
    %v1653 = vpop.f32.mrb[0].mxu0
    %v1654 = vadd.f32 %v1534, %v1653
    %v1655 = vpop.f32.mrb[0].mxu0
    %v1656 = vpop.f32.mrb[0].mxu0
    %1657 = vdwg.mxu0
    %v1658 = vmax.f32 %v1652, 0.0
    %v1659 = vmax.f32 %v1654, 0.0
    %v1660 = vpack.c.bf16 %v1658, %v1658
    %v1661 = vpack.c.bf16 %v1659, %v1659
    %v1662 = vld [vmem:[#allocation11] sm:$0xff]
    %v1663 = vld [vmem:[#allocation11 + $0x8] sm:$0xff]
    %v1664 = vld [vmem:[#allocation11 + $0x10] sm:$0xff]
    %v1665 = vld [vmem:[#allocation11 + $0x18] sm:$0xff]
    %v1666 = vld [vmem:[#allocation11 + $0x20] sm:$0xff]
    %v1667 = vld [vmem:[#allocation11 + $0x28] sm:$0xff]
    %v1668 = vld [vmem:[#allocation11 + $0x30] sm:$0xff]
    %v1669 = vld [vmem:[#allocation11 + $0x38] sm:$0xff]
    %v1670 = vld [vmem:[#allocation11 + $0x40] sm:$0xff]
    %v1671 = vld [vmem:[#allocation11 + $0x48] sm:$0xff]
    %v1672 = vld [vmem:[#allocation11 + $0x50] sm:$0xff]
    %v1673 = vld [vmem:[#allocation11 + $0x58] sm:$0xff]
    %v1674 = vld [vmem:[#allocation11 + $0x60] sm:$0xff]
    %v1675 = vld [vmem:[#allocation11 + $0x68] sm:$0xff]
    %v1676 = vld [vmem:[#allocation11 + $0x70] sm:$0xff]
    %v1677 = vld [vmem:[#allocation11 + $0x78] sm:$0xff]
    %v1678 = vld [vmem:[#allocation11 + $0x80] sm:$0xff]
    %v1679 = vld [vmem:[#allocation11 + $0x88] sm:$0xff]
    %v1680 = vld [vmem:[#allocation11 + $0x90] sm:$0xff]
    %v1681 = vld [vmem:[#allocation11 + $0x98] sm:$0xff]
    %v1682 = vld [vmem:[#allocation11 + $0xa0] sm:$0xff]
    %v1683 = vld [vmem:[#allocation11 + $0xa8] sm:$0xff]
    %v1684 = vld [vmem:[#allocation11 + $0xb0] sm:$0xff]
    %v1685 = vld [vmem:[#allocation11 + $0xb8] sm:$0xff]
    %v1686 = vld [vmem:[#allocation11 + $0xc0] sm:$0xff]
    %v1687 = vld [vmem:[#allocation11 + $0xc8] sm:$0xff]
    %v1688 = vld [vmem:[#allocation11 + $0xd0] sm:$0xff]
    %v1689 = vld [vmem:[#allocation11 + $0xd8] sm:$0xff]
    %v1690 = vld [vmem:[#allocation11 + $0xe0] sm:$0xff]
    %v1691 = vld [vmem:[#allocation11 + $0xe8] sm:$0xff]
    %v1692 = vld [vmem:[#allocation11 + $0xf0] sm:$0xff]
    %v1693 = vld [vmem:[#allocation11 + $0xf8] sm:$0xff]
    %v1694 = vld [vmem:[%s8] sm:$0x3]
    %v1696 = vlaneseq
    %v1697 = vshrl.u32 %v1696, 7
    %v1698 = vsub.s32 0, %v1697
    %v1699 = vrot.slane %v1694, %v1698
    %v1700 = vlaneseq
    %v1701 = vshrl.u32 %v1700, 7
    %v1702 = vsub.s32 1, %v1701
    %v1703 = vrot.slane %v1694, %v1702
    %v1738 = vunpack.c.l.b16 %v1662
    %v1739 = vunpack.c.h.b16 %v1662
    %v1740 = vunpack.c.l.b16 %v1663
    %v1741 = vunpack.c.h.b16 %v1663
    %v1742 = vunpack.c.l.b16 %v1664
    %v1743 = vunpack.c.h.b16 %v1664
    %v1744 = vunpack.c.l.b16 %v1665
    %v1745 = vunpack.c.h.b16 %v1665
    %v1746 = vunpack.c.l.b16 %v1666
    %v1747 = vunpack.c.h.b16 %v1666
    %v1748 = vunpack.c.l.b16 %v1667
    %v1749 = vunpack.c.h.b16 %v1667
    %v1750 = vunpack.c.l.b16 %v1668
    %v1751 = vunpack.c.h.b16 %v1668
    %v1752 = vunpack.c.l.b16 %v1669
    %v1753 = vunpack.c.h.b16 %v1669
    %v1754 = vunpack.c.l.b16 %v1670
    %v1755 = vunpack.c.h.b16 %v1670
    %v1756 = vunpack.c.l.b16 %v1671
    %v1757 = vunpack.c.h.b16 %v1671
    %v1758 = vunpack.c.l.b16 %v1672
    %v1759 = vunpack.c.h.b16 %v1672
    %v1760 = vunpack.c.l.b16 %v1673
    %v1761 = vunpack.c.h.b16 %v1673
    %v1762 = vunpack.c.l.b16 %v1674
    %v1763 = vunpack.c.h.b16 %v1674
    %v1764 = vunpack.c.l.b16 %v1675
    %v1765 = vunpack.c.h.b16 %v1675
    %v1766 = vunpack.c.l.b16 %v1676
    %v1767 = vunpack.c.h.b16 %v1676
    %v1768 = vunpack.c.l.b16 %v1677
    %v1769 = vunpack.c.h.b16 %v1677
    %v1770 = vunpack.c.l.b16 %v1678
    %v1771 = vunpack.c.h.b16 %v1678
    %v1772 = vunpack.c.l.b16 %v1679
    %v1773 = vunpack.c.h.b16 %v1679
    %v1774 = vunpack.c.l.b16 %v1680
    %v1775 = vunpack.c.h.b16 %v1680
    %v1776 = vunpack.c.l.b16 %v1681
    %v1777 = vunpack.c.h.b16 %v1681
    %v1778 = vunpack.c.l.b16 %v1682
    %v1779 = vunpack.c.h.b16 %v1682
    %v1780 = vunpack.c.l.b16 %v1683
    %v1781 = vunpack.c.h.b16 %v1683
    %v1782 = vunpack.c.l.b16 %v1684
    %v1783 = vunpack.c.h.b16 %v1684
    %v1784 = vunpack.c.l.b16 %v1685
    %v1785 = vunpack.c.h.b16 %v1685
    %v1786 = vunpack.c.l.b16 %v1686
    %v1787 = vunpack.c.h.b16 %v1686
    %v1788 = vunpack.c.l.b16 %v1687
    %v1789 = vunpack.c.h.b16 %v1687
    %v1790 = vunpack.c.l.b16 %v1688
    %v1791 = vunpack.c.h.b16 %v1688
    %v1792 = vunpack.c.l.b16 %v1689
    %v1793 = vunpack.c.h.b16 %v1689
    %v1794 = vunpack.c.l.b16 %v1690
    %v1795 = vunpack.c.h.b16 %v1690
    %v1796 = vunpack.c.l.b16 %v1691
    %v1797 = vunpack.c.h.b16 %v1691
    %v1798 = vunpack.c.l.b16 %v1692
    %v1799 = vunpack.c.h.b16 %v1692
    %v1800 = vunpack.c.l.b16 %v1693
    %v1801 = vunpack.c.h.b16 %v1693
    %v1802 = vpack.c.b16 %v1740, %v1738
    %v1803 = vpack.c.b16 %v1741, %v1739
    %v1804 = vpack.c.b16 %v1744, %v1742
    %v1805 = vpack.c.b16 %v1745, %v1743
    %v1806 = vpack.c.b16 %v1748, %v1746
    %v1807 = vpack.c.b16 %v1749, %v1747
    %v1808 = vpack.c.b16 %v1752, %v1750
    %v1809 = vpack.c.b16 %v1753, %v1751
    %v1810 = vpack.c.b16 %v1756, %v1754
    %v1811 = vpack.c.b16 %v1757, %v1755
    %v1812 = vpack.c.b16 %v1760, %v1758
    %v1813 = vpack.c.b16 %v1761, %v1759
    %v1814 = vpack.c.b16 %v1764, %v1762
    %v1815 = vpack.c.b16 %v1765, %v1763
    %v1816 = vpack.c.b16 %v1768, %v1766
    %v1817 = vpack.c.b16 %v1769, %v1767
    %v1818 = vpack.c.b16 %v1772, %v1770
    %v1819 = vpack.c.b16 %v1773, %v1771
    %v1820 = vpack.c.b16 %v1776, %v1774
    %v1821 = vpack.c.b16 %v1777, %v1775
    %v1822 = vpack.c.b16 %v1780, %v1778
    %v1823 = vpack.c.b16 %v1781, %v1779
    %v1824 = vpack.c.b16 %v1784, %v1782
    %v1825 = vpack.c.b16 %v1785, %v1783
    %v1826 = vpack.c.b16 %v1788, %v1786
    %v1827 = vpack.c.b16 %v1789, %v1787
    %v1828 = vpack.c.b16 %v1792, %v1790
    %v1829 = vpack.c.b16 %v1793, %v1791
    %v1830 = vpack.c.b16 %v1796, %v1794
    %v1831 = vpack.c.b16 %v1797, %v1795
    %v1832 = vpack.c.b16 %v1800, %v1798
    %v1833 = vpack.c.b16 %v1801, %v1799
    %1866 = vmatprep.subr.bf16.mxu0 %v1803
    %1867 = vmatpush1.bf16.msra.mxu0 %v1802
    %1868 = vmatprep.subr.bf16.mxu0 %v1805
    %1869 = vmatpush1.bf16.msra.mxu0 %v1804
    %1870 = vmatprep.subr.bf16.mxu0 %v1807
    %1871 = vmatpush1.bf16.msra.mxu0 %v1806
    %1872 = vmatprep.subr.bf16.mxu0 %v1809
    %1873 = vmatpush1.bf16.msra.mxu0 %v1808
    %1874 = vmatprep.subr.bf16.mxu0 %v1811
    %1875 = vmatpush1.bf16.msra.mxu0 %v1810
    %1876 = vmatprep.subr.bf16.mxu0 %v1813
    %1877 = vmatpush1.bf16.msra.mxu0 %v1812
    %1878 = vmatprep.subr.bf16.mxu0 %v1815
    %1879 = vmatpush1.bf16.msra.mxu0 %v1814
    %1880 = vmatprep.subr.bf16.mxu0 %v1817
    %1881 = vmatpush1.bf16.msra.mxu0 %v1816
    %1882 = vmatprep.subr.bf16.mxu0 %v1819
    %1883 = vmatpush1.bf16.msra.mxu0 %v1818
    %1884 = vmatprep.subr.bf16.mxu0 %v1821
    %1885 = vmatpush1.bf16.msra.mxu0 %v1820
    %1886 = vmatprep.subr.bf16.mxu0 %v1823
    %1887 = vmatpush1.bf16.msra.mxu0 %v1822
    %1888 = vmatprep.subr.bf16.mxu0 %v1825
    %1889 = vmatpush1.bf16.msra.mxu0 %v1824
    %1890 = vmatprep.subr.bf16.mxu0 %v1827
    %1891 = vmatpush1.bf16.msra.mxu0 %v1826
    %1892 = vmatprep.subr.bf16.mxu0 %v1829
    %1893 = vmatpush1.bf16.msra.mxu0 %v1828
    %1894 = vmatprep.subr.bf16.mxu0 %v1831
    %1895 = vmatpush1.bf16.msra.mxu0 %v1830
    %1896 = vmatprep.subr.bf16.mxu0 %v1833
    %1897 = vmatpush1.bf16.msra.mxu0 %v1832
    %1898 = vmatprep.mubr.bf16.mxu0 %v1661
    %1899 = vmatmul.mubr.bf16.gmra.mrb[0].mxu0 %v1660
    %v1900 = vpop.f32.mrb[0].mxu0
    %v1901 = vadd.f32 %v1699, %v1900
    %v1902 = vpop.f32.mrb[0].mxu0
    %v1903 = vadd.f32 %v1703, %v1902
    %v1904 = vpop.f32.mrb[0].mxu0
    %v1905 = vpop.f32.mrb[0].mxu0
    %1906 = vdwg.mxu0
    %v1907 = vmul.f32 %v1901, %v1901
    %1908 = vadd.xlane.f32.xlu0 %v1907
    %v1909 = vpop.xlane.xlu0 %1908
    %v1910 = vmax.f32 %v1909, 1e-24
    %v1911 = vrsqrt.pop %v1910
    %v1912 = vmul.f32 %v1901, %v1911
    %s1913 = scalar_lea.vmem [#allocation13], 16
    %1914 = vst [vmem:[%s1913] sm:$0xff] %v1912
    %v1915 = vsel %vm707, %v1903, -inf
    %1916 = vmax.xlane.f32.xlu0 %v1915
    %v1917 = vpop.xlane.xlu0 %1916
    %v1918 = vsub.f32 %v1903, %v1917
    %v1919 = vmul.f32 %v1918, 1.442695
    %v1920 = vpow.pop %v1919
    %v1921 = vsel %vm707, %v1920, 0.0
    %1922 = vadd.xlane.f32.xlu0 %v1921
    %v1923 = vpop.xlane.xlu0 %1922
    %v1924 = vrcp.pop %v1923
    %v1925 = vmul.f32 %v1921, %v1924
    %s1926 = scalar_lea.vmem [#allocation14], 16
    %1927 = vst [vmem:[%s1926] sm:$0xff] %v1925
    // Predicated region
    $region62: #{tpu_custom_call.1} parent=1 // pred_check
      _
    $region63: #{tpu_custom_call.1} parent=1 // pred_check_branch
      %1929 = sbr.rel (0) target = $region65
    $region64: #{tpu_custom_call.1} parent=1 // pred_region
      %s1931 = ssub.s32 384, 384
      %1932 = vsyncadd [#allocation4], %s1931
      %s1933 = sshll.u32 [#allocation13], 4
      %s1934 = int_to_ptr.vmem [resolvable:$true] %s1933
      %1939 = dma.vmem_to_hbm [thread:$0]  %s1934, 384, %s9, [#allocation4], 128, 128, 8
    $region65: #{tpu_custom_call.1} parent=1 // pred_fallthru
      _
    // Predicated region
    $region66: #{tpu_custom_call.1} parent=1 // pred_check
      _
    $region67: #{tpu_custom_call.1} parent=1 // pred_check_branch
      %1941 = sbr.rel (0) target = $region69
    $region68: #{tpu_custom_call.1} parent=1 // pred_region
      %s1943 = ssub.s32 384, 384
      %1944 = vsyncadd [#allocation15], %s1943
      %s1945 = sshll.u32 [#allocation14], 4
      %s1946 = int_to_ptr.vmem [resolvable:$true] %s1945
      %1951 = dma.vmem_to_hbm [thread:$0]  %s1946, 384, %s10, [#allocation15], 128, 128, 8
    $region69: #{tpu_custom_call.1} parent=1 // pred_fallthru
      _
    // Predicated region
    $region70: #{tpu_custom_call.1} parent=1 // pred_check
      _
    $region71: #{tpu_custom_call.1} parent=1 // pred_check_branch
      %1953 = sbr.rel (0) target = $region73
    $region72: #{tpu_custom_call.1} parent=1 // pred_region
      %1954 = dma.done [#allocation4], 384
    $region73: #{tpu_custom_call.1} parent=1 // pred_fallthru
      _
    // Predicated region
    $region74: #{tpu_custom_call.1} parent=1 // pred_check
      _
    $region75: #{tpu_custom_call.1} parent=1 // pred_check_branch
      %1956 = sbr.rel (0) target = $region77
    $region76: #{tpu_custom_call.1} parent=1 // pred_region
      %1957 = dma.done [#allocation15], 384
    $region77: #{tpu_custom_call.1} parent=1 // pred_fallthru
      _
    %1958 = vsyncpa [#allocation3], 1
    %1959 = vsyncpa [#allocation6], 1
    %1960 = vsyncpa [#allocation9], 1
    %1961 = vsyncpa [#allocation12], 1
    %1962 = vsyncpa [#allocation4], 1
    %1963 = vsyncpa [#allocation15], 1

</llo_original>
